<compile_context>
chip_gen: v7x
topology: tpu7x:2x2x1
jax: 0.10.0
libtpu: 0.0.40
codegen_flags: <defaults>
</compile_context>

<pallas_src>
import jax
import jax.numpy as jnp
from jax.experimental import pallas as pl
from jax.experimental.pallas import tpu as pltpu


def _leaky(x, slope=0.01):
    return jnp.where(x > 0, x, slope * x)


def _elu(x):
    return jnp.where(x > 0, x, jnp.exp(jnp.minimum(x, 0.0)) - 1.0)


def damp_kernel(f_all_ref, f_dst_ref, fe_ref, adj_ref,
                Wnf_ref, bnf_ref, Wee_ref, att_ref,
                Wm_ref, bm_ref, Wif_ref, bif_ref, Whf_ref, bhf_ref,
                hout_ref):
    N, _ = f_all_ref.shape
    Tv = f_dst_ref.shape[0]
    He = Wee_ref.shape[1]
    Hn = Whf_ref.shape[0]

    def mm(a, w):
        # MXU matmul: cast activations to the weight dtype (f32 or bf16), accumulate f32.
        return jnp.dot(a.astype(w.dtype), w, preferred_element_type=jnp.float32)

    f_all = f_all_ref[...]                      # (N, Fn)   all source nodes
    adj = adj_ref[...]                          # (Tv, N)   mask for this dst block
    att = att_ref[...]                          # (1, He+Hn+1) = [Wle^T | Wls^T | bl]
    wle = att[:, :He]                           # (1, He)
    wls = att[:, He:He + Hn]                    # (1, Hn)
    bl = att[:, He + Hn:He + Hn + 1]            # (1, 1)

    # ---- (1)+(2a) fused node projection over ALL source nodes w: [Wn | Wes] ------
    nproj_all = mm(f_all, Wnf_ref[...]) + bnf_ref[...]          # (N, Hn+He)
    h_all = _leaky(nproj_all[:, :Hn])                           # (N, Hn)  embed_node(f_w)
    src_part = nproj_all[:, Hn:]                                # (N, He)  Wes@f_w + be (pre-act)

    # destination-block node embedding (recomputed per grid step; O(Tv*Fn*Hn), tiny)
    h_dst = _leaky((mm(f_dst_ref[...], Wnf_ref[...]) + bnf_ref[...])[:, :Hn])   # (Tv, Hn)

    # ---- (2b) edge embedding h_e[v,w] = leaky(Wee@f_e[v,w] + Wes@f_w + be) -------
    edge_part = mm(fe_ref[...], Wee_ref[...])                   # (Tv*N, He)
    h_e = _leaky(edge_part.reshape(Tv, N, He) + src_part[None, :, :])   # (Tv, N, He)

    # ---- (3) attention logits (VPU multiply + lane reduce; no 1-wide MXU matmuls)
    logit_edge = jnp.sum(h_e * wle[None, :, :], axis=-1)        # (Tv, N)
    logit_src = jnp.sum(h_all * wls, axis=-1, keepdims=True) + bl   # (N, 1)
    logits = _leaky(logit_edge + logit_src.reshape(1, N))       # (Tv, N)

    # ---- (4) masked edge softmax over incoming edges w of each destination v ----
    masked = jnp.where(adj > 0, logits, jnp.float32(-1e30))
    lmax = jnp.max(masked, axis=1, keepdims=True)
    ex = jnp.exp(masked - lmax) * adj
    alpha = ex * pl.reciprocal(jnp.sum(ex, axis=1, keepdims=True), approx=True)
    # NOTE: isolated destination nodes (all-zero adj row) yield NaN, same as the reference.

    # ---- (5) context vector: fold the linear message layer AFTER the reduction --
    #      (valid because sum_w alpha == 1 and dropout == 0)
    weighted = jnp.sum(alpha[:, :, None] * h_e, axis=1)         # (Tv, He)
    C = _elu(mm(weighted, Wm_ref[...]) + bm_ref[...])           # (Tv, Ctx)

    # ---- (6) GRUCell(C, h_dst) followed by ReLU, fused [r|z|n] projections -------
    ip = mm(C, Wif_ref[...]) + bif_ref[...]                     # (Tv, 3*Hn)
    hp = mm(h_dst, Whf_ref[...]) + bhf_ref[...]                 # (Tv, 3*Hn)
    r = jax.nn.sigmoid(ip[:, :Hn] + hp[:, :Hn])
    z = jax.nn.sigmoid(ip[:, Hn:2 * Hn] + hp[:, Hn:2 * Hn])
    n = jnp.tanh(ip[:, 2 * Hn:] + r * hp[:, 2 * Hn:])
    h_new = (1.0 - z) * n + z * h_dst
    hout_ref[...] = jnp.maximum(h_new, 0.0)


def _pick_tv(N, Fe, He, vmem_budget_bytes=24 * 1024 * 1024):
    """Pick a destination-tile size whose working set stays well under the v7x
    scoped-VMEM limit (double-buffered edge tile + h_e/edge_part + softmax temps)."""
    per_row = N * 4 * (2 * Fe + 2 * He + 8)
    tv = min(N, max(8, (vmem_budget_bytes // max(per_row, 1)) // 8 * 8))
    while N % tv:
        tv -= 8
    return tv


def damp_forward(node_feats, edge_feats, adj, params, *, tv=None,
                 compute_dtype=jnp.float32):
    """Pallas-backed DAMPLayer forward. Returns (h'_v, f_w->v) (update_edges=False)."""
    N, Fn = node_feats.shape
    Fe = edge_feats.shape[-1]
    Hn = params["Wn"].shape[1]
    He = params["Wee"].shape[1]
    Ctx = params["Wm"].shape[1]
    assert N % 8 == 0, "dense-graph wrapper expects N % 8 == 0 (pad nodes/adj if needed)"
    if tv is None:
        tv = _pick_tv(N, Fe, He)
    assert N % tv == 0 and tv % 8 == 0

    f32 = jnp.float32
    # ---- wrapper-side weight fusion / packing (done once, outside the kernel) ----
    W_nf = jnp.concatenate([params["Wn"], params["Wes"]], axis=1).astype(compute_dtype)
    b_nf = jnp.concatenate([params["bn"], params["be"]], axis=1).astype(f32)
    att = jnp.concatenate([params["Wle"].reshape(1, He),
                           params["Wls"].reshape(1, Hn),
                           params["bl"].reshape(1, 1)], axis=1).astype(f32)
    W_ee = params["Wee"].astype(compute_dtype)
    W_m = params["Wm"].astype(compute_dtype)
    b_m = params["bm"].astype(f32)
    W_if = jnp.concatenate([params["Wir"], params["Wiz"], params["Win"]], axis=1).astype(compute_dtype)
    b_if = jnp.concatenate([params["bir"], params["biz"], params["bin"]], axis=1).astype(f32)
    W_hf = jnp.concatenate([params["Whr"], params["Whz"], params["Whn"]], axis=1).astype(compute_dtype)
    b_hf = jnp.concatenate([params["bhr"], params["bhz"], params["bhn"]], axis=1).astype(f32)

    f_cast = node_feats.astype(compute_dtype)
    fe_flat = edge_feats.reshape(N * N, Fe).astype(compute_dtype)   # row v*N + w
    adj_f32 = adj.astype(f32)

    def full(shape):
        nd = len(shape)
        return pl.BlockSpec(shape, lambda i, _nd=nd: (0,) * _nd)

    in_specs = [
        full((N, Fn)),                                   # f_all (all sources, every step)
        pl.BlockSpec((tv, Fn), lambda i: (i, 0)),        # f_dst (destination block)
        pl.BlockSpec((tv * N, Fe), lambda i: (i, 0)),    # edge block (flat, dst-major)
        pl.BlockSpec((tv, N), lambda i: (i, 0)),         # adjacency block
        full(W_nf.shape), full(b_nf.shape),
        full(W_ee.shape), full(att.shape),
        full(W_m.shape), full(b_m.shape),
        full(W_if.shape), full(b_if.shape),
        full(W_hf.shape), full(b_hf.shape),
    ]

    h_out = pl.pallas_call(
        damp_kernel,
        out_shape=jax.ShapeDtypeStruct((N, Hn), jnp.float32),
        grid=(N // tv,),
        in_specs=in_specs,
        out_specs=pl.BlockSpec((tv, Hn), lambda i: (i, 0)),
        compiler_params=pltpu.CompilerParams(
            # independent destination blocks -> megacore sharding on v7x
            dimension_semantics=("parallel",),
            # explicit scoped-VMEM limit; _pick_tv keeps the working set under ~24 MiB
            vmem_limit_bytes=32 * 1024 * 1024,
        ),
    )(f_cast, f_cast, fe_flat, adj_f32,
      W_nf, b_nf, W_ee, att, W_m, b_m, W_if, b_if, W_hf, b_hf)
    return h_out, edge_feats


def init_params(key, Fn, Fe, Hn, He, Ctx):
    shapes = {
        "Wn": (Fn, Hn), "bn": (1, Hn),
        "Wes": (Fn, He), "Wee": (Fe, He), "be": (1, He),
        "Wls": (Hn, 1), "Wle": (He, 1), "bl": (1, 1),
        "Wm": (He, Ctx), "bm": (1, Ctx),
        "Wir": (Ctx, Hn), "Wiz": (Ctx, Hn), "Win": (Ctx, Hn),
        "Whr": (Hn, Hn), "Whz": (Hn, Hn), "Whn": (Hn, Hn),
        "bir": (1, Hn), "biz": (1, Hn), "bin": (1, Hn),
        "bhr": (1, Hn), "bhz": (1, Hn), "bhn": (1, Hn),
    }
    keys = jax.random.split(key, len(shapes))
    return {name: 0.1 * jax.random.normal(k, shp, jnp.float32)
            for (name, shp), k in zip(shapes.items(), keys)}


def damp_reference(node_feats, edge_feats, adj, p):
    """Pure-JAX reference of the same dense-graph semantics (for sanity check)."""
    hi = jax.lax.Precision.HIGHEST
    leaky = lambda x: jnp.where(x > 0, x, 0.01 * x)
    h_v = leaky(jnp.dot(node_feats, p["Wn"], precision=hi) + p["bn"])
    h_e = leaky(jnp.einsum("wf,fh->wh", node_feats, p["Wes"], precision=hi)[None, :, :]
                + jnp.einsum("vwf,fh->vwh", edge_feats, p["Wee"], precision=hi)
                + p["be"])
    logit_edge = jnp.einsum("vwh,hk->vwk", h_e, p["Wle"], precision=hi)[:, :, 0]
    logit_src = jnp.dot(h_v, p["Wls"], precision=hi)[:, 0]
    logits = leaky(logit_edge + logit_src[None, :] + p["bl"][0, 0])
    masked = jnp.where(adj > 0, logits, -1e30)
    ex = jnp.exp(masked - masked.max(axis=1, keepdims=True)) * adj
    alpha = ex / ex.sum(axis=1, keepdims=True)
    msg = jnp.einsum("vwh,hc->vwc", h_e, p["Wm"], precision=hi) + p["bm"]
    C = jnp.einsum("vw,vwc->vc", alpha, msg, precision=hi)
    C = jnp.where(C > 0, C, jnp.exp(jnp.minimum(C, 0.0)) - 1.0)
    r = jax.nn.sigmoid(jnp.dot(C, p["Wir"], precision=hi) + p["bir"]
                       + jnp.dot(h_v, p["Whr"], precision=hi) + p["bhr"])
    z = jax.nn.sigmoid(jnp.dot(C, p["Wiz"], precision=hi) + p["biz"]
                       + jnp.dot(h_v, p["Whz"], precision=hi) + p["bhz"])
    n = jnp.tanh(jnp.dot(C, p["Win"], precision=hi) + p["bin"]
                 + r * (jnp.dot(h_v, p["Whn"], precision=hi) + p["bhn"]))
    return jnp.maximum((1.0 - z) * n + z * h_v, 0.0)


if __name__ == "__main__":
    # N nodes, fully connected directed graph without self loops.
    N, Fn, Fe, Hn, He, Ctx = 16, 16, 8, 32, 32, 32
    key = jax.random.PRNGKey(0)
    k1, k2, k3 = jax.random.split(key, 3)
    node_feats = jax.random.normal(k1, (N, Fn), jnp.float32)
    edge_feats = jax.random.normal(k2, (N, N, Fe), jnp.float32)
    adj = 1.0 - jnp.eye(N, dtype=jnp.float32)
    params = init_params(k3, Fn, Fe, Hn, He, Ctx)

    h_ref = damp_reference(node_feats, edge_feats, adj, params)

    # f32 MXU path, tiled over destination nodes (grid of 2 blocks of 8).
    h_out, edge_out = damp_forward(node_feats, edge_feats, adj, params, tv=8)
    h_out = jax.block_until_ready(h_out)
    assert h_out.shape == (N, Hn) and edge_out.shape == edge_feats.shape
    if not bool(jnp.allclose(h_out, h_ref, rtol=2e-2, atol=2e-2)):
        raise AssertionError("f32 Pallas kernel output does not match JAX reference")

    # bf16 MXU-input path (v6e/v7x optimization), f32 accumulation & elementwise math.
    h_bf16, _ = damp_forward(node_feats, edge_feats, adj, params, tv=8,
                             compute_dtype=jnp.bfloat16)
    h_bf16 = jax.block_until_ready(h_bf16)
    if not bool(jnp.allclose(h_bf16, h_ref, rtol=1e-1, atol=1e-1)):
        raise AssertionError("bf16 Pallas kernel output does not match JAX reference")

    print("KERNEL_OK")
</pallas_src>

<mosaic_0001>
module attributes {stable_mosaic.version = 11 : i64} {
  func.func @damp_kernel(%arg0: i32, %arg1: memref<16x16xf32, #tpu.memory_space<vmem>>, %arg2: memref<8x16xf32, #tpu.memory_space<vmem>>, %arg3: memref<128x8xf32, #tpu.memory_space<vmem>>, %arg4: memref<8x16xf32, #tpu.memory_space<vmem>>, %arg5: memref<16x64xf32, #tpu.memory_space<vmem>>, %arg6: memref<1x64xf32, #tpu.memory_space<vmem>>, %arg7: memref<8x32xf32, #tpu.memory_space<vmem>>, %arg8: memref<1x65xf32, #tpu.memory_space<vmem>>, %arg9: memref<32x32xf32, #tpu.memory_space<vmem>>, %arg10: memref<1x32xf32, #tpu.memory_space<vmem>>, %arg11: memref<32x96xf32, #tpu.memory_space<vmem>>, %arg12: memref<1x96xf32, #tpu.memory_space<vmem>>, %arg13: memref<32x96xf32, #tpu.memory_space<vmem>>, %arg14: memref<1x96xf32, #tpu.memory_space<vmem>>, %arg15: memref<8x32xf32, #tpu.memory_space<vmem>>) attributes {dimension_semantics = [#tpu.dimension_semantics<parallel>], iteration_bounds = array<i64: 2>, scalar_prefetch = 0 : i64, scratch_operands = 0 : i64, tpu.core_type = #tpu.core_type<tc>, window_params = [{pipeline_mode = #tpu.pipeline_mode<synchronous>, transform_indices = @transform_0, window_bounds = array<i64: 16, 16>}, {transform_indices = @transform_1, window_bounds = array<i64: 8, 16>}, {transform_indices = @transform_2, window_bounds = array<i64: 128, 8>}, {transform_indices = @transform_3, window_bounds = array<i64: 8, 16>}, {pipeline_mode = #tpu.pipeline_mode<synchronous>, transform_indices = @transform_4, window_bounds = array<i64: 16, 64>}, {pipeline_mode = #tpu.pipeline_mode<synchronous>, transform_indices = @transform_5, window_bounds = array<i64: 1, 64>}, {pipeline_mode = #tpu.pipeline_mode<synchronous>, transform_indices = @transform_6, window_bounds = array<i64: 8, 32>}, {pipeline_mode = #tpu.pipeline_mode<synchronous>, transform_indices = @transform_7, window_bounds = array<i64: 1, 65>}, {pipeline_mode = #tpu.pipeline_mode<synchronous>, transform_indices = @transform_8, window_bounds = array<i64: 32, 32>}, {pipeline_mode = #tpu.pipeline_mode<synchronous>, transform_indices = @transform_9, window_bounds = array<i64: 1, 32>}, {pipeline_mode = #tpu.pipeline_mode<synchronous>, transform_indices = @transform_10, window_bounds = array<i64: 32, 96>}, {pipeline_mode = #tpu.pipeline_mode<synchronous>, transform_indices = @transform_11, window_bounds = array<i64: 1, 96>}, {pipeline_mode = #tpu.pipeline_mode<synchronous>, transform_indices = @transform_12, window_bounds = array<i64: 32, 96>}, {pipeline_mode = #tpu.pipeline_mode<synchronous>, transform_indices = @transform_13, window_bounds = array<i64: 1, 96>}, {transform_indices = @transform_14, window_bounds = array<i64: 8, 32>}]} {
    %c0 = arith.constant 0 : index
    %c0_0 = arith.constant 0 : index
    %0 = vector.load %arg1[%c0, %c0_0] : memref<16x16xf32, #tpu.memory_space<vmem>>, vector<16x16xf32>
    %c0_1 = arith.constant 0 : index
    %c0_2 = arith.constant 0 : index
    %1 = vector.load %arg4[%c0_1, %c0_2] : memref<8x16xf32, #tpu.memory_space<vmem>>, vector<8x16xf32>
    %c0_3 = arith.constant 0 : index
    %c0_4 = arith.constant 0 : index
    %2 = vector.load %arg8[%c0_3, %c0_4] : memref<1x65xf32, #tpu.memory_space<vmem>>, vector<1x65xf32>
    %3 = vector.extract_strided_slice %2 {offsets = [0, 0], sizes = [1, 32], strides = [1, 1]} : vector<1x65xf32> to vector<1x32xf32>
    %4 = vector.extract_strided_slice %2 {offsets = [0, 32], sizes = [1, 32], strides = [1, 1]} : vector<1x65xf32> to vector<1x32xf32>
    %5 = vector.extract_strided_slice %2 {offsets = [0, 64], sizes = [1, 1], strides = [1, 1]} : vector<1x65xf32> to vector<1x1xf32>
    %c0_5 = arith.constant 0 : index
    %c0_6 = arith.constant 0 : index
    %6 = vector.load %arg5[%c0_5, %c0_6] : memref<16x64xf32, #tpu.memory_space<vmem>>, vector<16x64xf32>
    %cst = arith.constant dense<0.000000e+00> : vector<16x64xf32>
    %7 = tpu.matmul %0, %6, %cst {dimension_numbers = #tpu.dot_dimension_numbers<[1], [0], [0], [1], [0, 0, 1, 1], [], []>} : vector<16x16xf32>, vector<16x64xf32>, vector<16x64xf32> -> vector<16x64xf32>
    %c0_7 = arith.constant 0 : index
    %c0_8 = arith.constant 0 : index
    %8 = vector.load %arg6[%c0_7, %c0_8] : memref<1x64xf32, #tpu.memory_space<vmem>>, vector<1x64xf32>
    %9 = vector.broadcast %8 : vector<1x64xf32> to vector<16x64xf32>
    %10 = arith.addf %7, %9 : vector<16x64xf32>
    %11 = vector.extract_strided_slice %10 {offsets = [0, 0], sizes = [16, 32], strides = [1, 1]} : vector<16x64xf32> to vector<16x32xf32>
    %cst_9 = arith.constant 0.000000e+00 : f32
    %12 = vector.broadcast %cst_9 : f32 to vector<16x32xf32>
    %13 = arith.cmpf ogt, %11, %12 : vector<16x32xf32>
    %cst_10 = arith.constant 0.00999999977 : f32
    %14 = vector.broadcast %cst_10 : f32 to vector<16x32xf32>
    %15 = arith.mulf %14, %11 : vector<16x32xf32>
    %16 = arith.select %13, %11, %15 : vector<16x32xi1>, vector<16x32xf32>
    %17 = vector.extract_strided_slice %10 {offsets = [0, 32], sizes = [16, 32], strides = [1, 1]} : vector<16x64xf32> to vector<16x32xf32>
    %c0_11 = arith.constant 0 : index
    %c0_12 = arith.constant 0 : index
    %18 = vector.load %arg2[%c0_11, %c0_12] : memref<8x16xf32, #tpu.memory_space<vmem>>, vector<8x16xf32>
    %c0_13 = arith.constant 0 : index
    %c0_14 = arith.constant 0 : index
    %19 = vector.load %arg5[%c0_13, %c0_14] : memref<16x64xf32, #tpu.memory_space<vmem>>, vector<16x64xf32>
    %cst_15 = arith.constant dense<0.000000e+00> : vector<8x64xf32>
    %20 = tpu.matmul %18, %19, %cst_15 {dimension_numbers = #tpu.dot_dimension_numbers<[1], [0], [0], [1], [0, 0, 1, 1], [], []>} : vector<8x16xf32>, vector<16x64xf32>, vector<8x64xf32> -> vector<8x64xf32>
    %c0_16 = arith.constant 0 : index
    %c0_17 = arith.constant 0 : index
    %21 = vector.load %arg6[%c0_16, %c0_17] : memref<1x64xf32, #tpu.memory_space<vmem>>, vector<1x64xf32>
    %22 = vector.broadcast %21 : vector<1x64xf32> to vector<8x64xf32>
    %23 = arith.addf %20, %22 : vector<8x64xf32>
    %24 = vector.extract_strided_slice %23 {offsets = [0, 0], sizes = [8, 32], strides = [1, 1]} : vector<8x64xf32> to vector<8x32xf32>
    %cst_18 = arith.constant 0.000000e+00 : f32
    %25 = vector.broadcast %cst_18 : f32 to vector<8x32xf32>
    %26 = arith.cmpf ogt, %24, %25 : vector<8x32xf32>
    %cst_19 = arith.constant 0.00999999977 : f32
    %27 = vector.broadcast %cst_19 : f32 to vector<8x32xf32>
    %28 = arith.mulf %27, %24 : vector<8x32xf32>
    %29 = arith.select %26, %24, %28 : vector<8x32xi1>, vector<8x32xf32>
    %c0_20 = arith.constant 0 : index
    %c0_21 = arith.constant 0 : index
    %30 = vector.load %arg3[%c0_20, %c0_21] : memref<128x8xf32, #tpu.memory_space<vmem>>, vector<128x8xf32>
    %c0_22 = arith.constant 0 : index
    %c0_23 = arith.constant 0 : index
    %31 = vector.load %arg7[%c0_22, %c0_23] : memref<8x32xf32, #tpu.memory_space<vmem>>, vector<8x32xf32>
    %cst_24 = arith.constant dense<0.000000e+00> : vector<128x32xf32>
    %32 = tpu.matmul %30, %31, %cst_24 {dimension_numbers = #tpu.dot_dimension_numbers<[1], [0], [0], [1], [0, 0, 1, 1], [], []>} : vector<128x8xf32>, vector<8x32xf32>, vector<128x32xf32> -> vector<128x32xf32>
    %33 = vector.shape_cast %32 : vector<128x32xf32> to vector<8x16x32xf32>
    %34 = vector.shape_cast %17 : vector<16x32xf32> to vector<1x16x32xf32>
    %35 = vector.broadcast %34 : vector<1x16x32xf32> to vector<8x16x32xf32>
    %36 = arith.addf %33, %35 : vector<8x16x32xf32>
    %cst_25 = arith.constant 0.000000e+00 : f32
    %37 = vector.broadcast %cst_25 : f32 to vector<8x16x32xf32>
    %38 = arith.cmpf ogt, %36, %37 : vector<8x16x32xf32>
    %cst_26 = arith.constant 0.00999999977 : f32
    %39 = vector.broadcast %cst_26 : f32 to vector<8x16x32xf32>
    %40 = arith.mulf %39, %36 : vector<8x16x32xf32>
    %41 = arith.select %38, %36, %40 : vector<8x16x32xi1>, vector<8x16x32xf32>
    %42 = vector.shape_cast %3 : vector<1x32xf32> to vector<1x1x32xf32>
    %43 = vector.broadcast %42 : vector<1x1x32xf32> to vector<8x16x32xf32>
    %44 = arith.mulf %41, %43 : vector<8x16x32xf32>
    %cst_27 = arith.constant dense<0.000000e+00> : vector<8x16xf32>
    %45 = vector.multi_reduction <add>, %44, %cst_27 [2] : vector<8x16x32xf32> to vector<8x16xf32>
    %46 = vector.broadcast %4 : vector<1x32xf32> to vector<16x32xf32>
    %47 = arith.mulf %16, %46 : vector<16x32xf32>
    %cst_28 = arith.constant dense<0.000000e+00> : vector<16xf32>
    %48 = vector.multi_reduction <add>, %47, %cst_28 [1] : vector<16x32xf32> to vector<16xf32>
    %49 = vector.shape_cast %48 : vector<16xf32> to vector<16x1xf32>
    %50 = vector.broadcast %5 : vector<1x1xf32> to vector<16x1xf32>
    %51 = arith.addf %49, %50 : vector<16x1xf32>
    %52 = vector.shape_cast %51 : vector<16x1xf32> to vector<1x16xf32>
    %53 = vector.broadcast %52 : vector<1x16xf32> to vector<8x16xf32>
    %54 = arith.addf %45, %53 : vector<8x16xf32>
    %cst_29 = arith.constant 0.000000e+00 : f32
    %55 = vector.broadcast %cst_29 : f32 to vector<8x16xf32>
    %56 = arith.cmpf ogt, %54, %55 : vector<8x16xf32>
    %cst_30 = arith.constant 0.00999999977 : f32
    %57 = vector.broadcast %cst_30 : f32 to vector<8x16xf32>
    %58 = arith.mulf %57, %54 : vector<8x16xf32>
    %59 = arith.select %56, %54, %58 : vector<8x16xi1>, vector<8x16xf32>
    %cst_31 = arith.constant 0.000000e+00 : f32
    %60 = vector.broadcast %cst_31 : f32 to vector<8x16xf32>
    %61 = arith.cmpf ogt, %1, %60 : vector<8x16xf32>
    %cst_32 = arith.constant -1.000000e+30 : f32
    %62 = vector.broadcast %cst_32 : f32 to vector<8x16xf32>
    %63 = arith.select %61, %59, %62 : vector<8x16xi1>, vector<8x16xf32>
    %cst_33 = arith.constant dense<0xFF800000> : vector<8xf32>
    %64 = vector.multi_reduction <maximumf>, %63, %cst_33 [1] : vector<8x16xf32> to vector<8xf32>
    %65 = vector.shape_cast %64 : vector<8xf32> to vector<8x1xf32>
    %66 = vector.broadcast %65 : vector<8x1xf32> to vector<8x16xf32>
    %67 = arith.subf %63, %66 : vector<8x16xf32>
    %68 = math.exp %67 : vector<8x16xf32>
    %69 = arith.mulf %68, %1 : vector<8x16xf32>
    %cst_34 = arith.constant dense<0.000000e+00> : vector<8xf32>
    %70 = vector.multi_reduction <add>, %69, %cst_34 [1] : vector<8x16xf32> to vector<8xf32>
    %71 = vector.shape_cast %70 : vector<8xf32> to vector<8x1xf32>
    %72 = tpu.reciprocal %71 {approx = true} : vector<8x1xf32> -> vector<8x1xf32>
    %73 = vector.broadcast %72 : vector<8x1xf32> to vector<8x16xf32>
    %74 = arith.mulf %69, %73 : vector<8x16xf32>
    %75 = vector.shape_cast %74 : vector<8x16xf32> to vector<8x16x1xf32>
    %76 = vector.broadcast %75 : vector<8x16x1xf32> to vector<8x16x32xf32>
    %77 = arith.mulf %76, %41 : vector<8x16x32xf32>
    %cst_35 = arith.constant dense<0.000000e+00> : vector<8x32xf32>
    %78 = vector.multi_reduction <add>, %77, %cst_35 [1] : vector<8x16x32xf32> to vector<8x32xf32>
    %c0_36 = arith.constant 0 : index
    %c0_37 = arith.constant 0 : index
    %79 = vector.load %arg9[%c0_36, %c0_37] : memref<32x32xf32, #tpu.memory_space<vmem>>, vector<32x32xf32>
    %cst_38 = arith.constant dense<0.000000e+00> : vector<8x32xf32>
    %80 = tpu.matmul %78, %79, %cst_38 {dimension_numbers = #tpu.dot_dimension_numbers<[1], [0], [0], [1], [0, 0, 1, 1], [], []>} : vector<8x32xf32>, vector<32x32xf32>, vector<8x32xf32> -> vector<8x32xf32>
    %c0_39 = arith.constant 0 : index
    %c0_40 = arith.constant 0 : index
    %81 = vector.load %arg10[%c0_39, %c0_40] : memref<1x32xf32, #tpu.memory_space<vmem>>, vector<1x32xf32>
    %82 = vector.broadcast %81 : vector<1x32xf32> to vector<8x32xf32>
    %83 = arith.addf %80, %82 : vector<8x32xf32>
    %cst_41 = arith.constant 0.000000e+00 : f32
    %84 = vector.broadcast %cst_41 : f32 to vector<8x32xf32>
    %85 = arith.cmpf ogt, %83, %84 : vector<8x32xf32>
    %cst_42 = arith.constant 0.000000e+00 : f32
    %86 = vector.broadcast %cst_42 : f32 to vector<8x32xf32>
    %87 = arith.minimumf %83, %86 : vector<8x32xf32>
    %88 = math.exp %87 : vector<8x32xf32>
    %cst_43 = arith.constant 1.000000e+00 : f32
    %89 = vector.broadcast %cst_43 : f32 to vector<8x32xf32>
    %90 = arith.subf %88, %89 : vector<8x32xf32>
    %91 = arith.select %85, %83, %90 : vector<8x32xi1>, vector<8x32xf32>
    %c0_44 = arith.constant 0 : index
    %c0_45 = arith.constant 0 : index
    %92 = vector.load %arg11[%c0_44, %c0_45] : memref<32x96xf32, #tpu.memory_space<vmem>>, vector<32x96xf32>
    %cst_46 = arith.constant dense<0.000000e+00> : vector<8x96xf32>
    %93 = tpu.matmul %91, %92, %cst_46 {dimension_numbers = #tpu.dot_dimension_numbers<[1], [0], [0], [1], [0, 0, 1, 1], [], []>} : vector<8x32xf32>, vector<32x96xf32>, vector<8x96xf32> -> vector<8x96xf32>
    %c0_47 = arith.constant 0 : index
    %c0_48 = arith.constant 0 : index
    %94 = vector.load %arg12[%c0_47, %c0_48] : memref<1x96xf32, #tpu.memory_space<vmem>>, vector<1x96xf32>
    %95 = vector.broadcast %94 : vector<1x96xf32> to vector<8x96xf32>
    %96 = arith.addf %93, %95 : vector<8x96xf32>
    %c0_49 = arith.constant 0 : index
    %c0_50 = arith.constant 0 : index
    %97 = vector.load %arg13[%c0_49, %c0_50] : memref<32x96xf32, #tpu.memory_space<vmem>>, vector<32x96xf32>
    %cst_51 = arith.constant dense<0.000000e+00> : vector<8x96xf32>
    %98 = tpu.matmul %29, %97, %cst_51 {dimension_numbers = #tpu.dot_dimension_numbers<[1], [0], [0], [1], [0, 0, 1, 1], [], []>} : vector<8x32xf32>, vector<32x96xf32>, vector<8x96xf32> -> vector<8x96xf32>
    %c0_52 = arith.constant 0 : index
    %c0_53 = arith.constant 0 : index
    %99 = vector.load %arg14[%c0_52, %c0_53] : memref<1x96xf32, #tpu.memory_space<vmem>>, vector<1x96xf32>
    %100 = vector.broadcast %99 : vector<1x96xf32> to vector<8x96xf32>
    %101 = arith.addf %98, %100 : vector<8x96xf32>
    %102 = vector.extract_strided_slice %96 {offsets = [0, 0], sizes = [8, 32], strides = [1, 1]} : vector<8x96xf32> to vector<8x32xf32>
    %103 = vector.extract_strided_slice %101 {offsets = [0, 0], sizes = [8, 32], strides = [1, 1]} : vector<8x96xf32> to vector<8x32xf32>
    %104 = arith.addf %102, %103 : vector<8x32xf32>
    %105 = arith.negf %104 : vector<8x32xf32>
    %106 = math.exp %105 : vector<8x32xf32>
    %cst_54 = arith.constant 1.000000e+00 : f32
    %107 = vector.broadcast %cst_54 : f32 to vector<8x32xf32>
    %108 = arith.addf %107, %106 : vector<8x32xf32>
    %109 = arith.divf %107, %108 : vector<8x32xf32>
    %110 = vector.extract_strided_slice %96 {offsets = [0, 32], sizes = [8, 32], strides = [1, 1]} : vector<8x96xf32> to vector<8x32xf32>
    %111 = vector.extract_strided_slice %101 {offsets = [0, 32], sizes = [8, 32], strides = [1, 1]} : vector<8x96xf32> to vector<8x32xf32>
    %112 = arith.addf %110, %111 : vector<8x32xf32>
    %113 = arith.negf %112 : vector<8x32xf32>
    %114 = math.exp %113 : vector<8x32xf32>
    %cst_55 = arith.constant 1.000000e+00 : f32
    %115 = vector.broadcast %cst_55 : f32 to vector<8x32xf32>
    %116 = arith.addf %115, %114 : vector<8x32xf32>
    %117 = arith.divf %115, %116 : vector<8x32xf32>
    %118 = vector.extract_strided_slice %96 {offsets = [0, 64], sizes = [8, 32], strides = [1, 1]} : vector<8x96xf32> to vector<8x32xf32>
    %119 = vector.extract_strided_slice %101 {offsets = [0, 64], sizes = [8, 32], strides = [1, 1]} : vector<8x96xf32> to vector<8x32xf32>
    %120 = arith.mulf %109, %119 : vector<8x32xf32>
    %121 = arith.addf %118, %120 : vector<8x32xf32>
    %122 = math.tanh %121 : vector<8x32xf32>
    %cst_56 = arith.constant 1.000000e+00 : f32
    %123 = vector.broadcast %cst_56 : f32 to vector<8x32xf32>
    %124 = arith.subf %123, %117 : vector<8x32xf32>
    %125 = arith.mulf %124, %122 : vector<8x32xf32>
    %126 = arith.mulf %117, %29 : vector<8x32xf32>
    %127 = arith.addf %125, %126 : vector<8x32xf32>
    %cst_57 = arith.constant 0.000000e+00 : f32
    %128 = vector.broadcast %cst_57 : f32 to vector<8x32xf32>
    %129 = arith.maximumf %127, %128 : vector<8x32xf32>
    %c0_58 = arith.constant 0 : index
    %c0_59 = arith.constant 0 : index
    %130 = vector.load %arg15[%c0_58, %c0_59] : memref<8x32xf32, #tpu.memory_space<vmem>>, vector<8x32xf32>
    tpu.vector_store %arg15[%c0_58, %c0_59], %129 {strides = array<i32>} : memref<8x32xf32, #tpu.memory_space<vmem>>, vector<8x32xf32>,
    return
  }
  func.func @transform_0(%arg0: i32) -> (i32, i32) {
    %c0_i32 = arith.constant 0 : i32
    %c0_i32_0 = arith.constant 0 : i32
    %c0_i32_1 = arith.constant 0 : i32
    return %c0_i32, %c0_i32_0 : i32, i32
  }
  func.func @transform_1(%arg0: i32) -> (i32, i32) {
    %c0_i32 = arith.constant 0 : i32
    %c0_i32_0 = arith.constant 0 : i32
    return %arg0, %c0_i32 : i32, i32
  }
  func.func @transform_2(%arg0: i32) -> (i32, i32) {
    %c0_i32 = arith.constant 0 : i32
    %c0_i32_0 = arith.constant 0 : i32
    return %arg0, %c0_i32 : i32, i32
  }
  func.func @transform_3(%arg0: i32) -> (i32, i32) {
    %c0_i32 = arith.constant 0 : i32
    %c0_i32_0 = arith.constant 0 : i32
    return %arg0, %c0_i32 : i32, i32
  }
  func.func @transform_4(%arg0: i32) -> (i32, i32) {
    %c0_i32 = arith.constant 0 : i32
    %c0_i32_0 = arith.constant 0 : i32
    %c0_i32_1 = arith.constant 0 : i32
    return %c0_i32, %c0_i32_0 : i32, i32
  }
  func.func @transform_5(%arg0: i32) -> (i32, i32) {
    %c0_i32 = arith.constant 0 : i32
    %c0_i32_0 = arith.constant 0 : i32
    %c0_i32_1 = arith.constant 0 : i32
    return %c0_i32, %c0_i32_0 : i32, i32
  }
  func.func @transform_6(%arg0: i32) -> (i32, i32) {
    %c0_i32 = arith.constant 0 : i32
    %c0_i32_0 = arith.constant 0 : i32
    %c0_i32_1 = arith.constant 0 : i32
    return %c0_i32, %c0_i32_0 : i32, i32
  }
  func.func @transform_7(%arg0: i32) -> (i32, i32) {
    %c0_i32 = arith.constant 0 : i32
    %c0_i32_0 = arith.constant 0 : i32
    %c0_i32_1 = arith.constant 0 : i32
    return %c0_i32, %c0_i32_0 : i32, i32
  }
  func.func @transform_8(%arg0: i32) -> (i32, i32) {
    %c0_i32 = arith.constant 0 : i32
    %c0_i32_0 = arith.constant 0 : i32
    %c0_i32_1 = arith.constant 0 : i32
    return %c0_i32, %c0_i32_0 : i32, i32
  }
  func.func @transform_9(%arg0: i32) -> (i32, i32) {
    %c0_i32 = arith.constant 0 : i32
    %c0_i32_0 = arith.constant 0 : i32
    %c0_i32_1 = arith.constant 0 : i32
    return %c0_i32, %c0_i32_0 : i32, i32
  }
  func.func @transform_10(%arg0: i32) -> (i32, i32) {
    %c0_i32 = arith.constant 0 : i32
    %c0_i32_0 = arith.constant 0 : i32
    %c0_i32_1 = arith.constant 0 : i32
    return %c0_i32, %c0_i32_0 : i32, i32
  }
  func.func @transform_11(%arg0: i32) -> (i32, i32) {
    %c0_i32 = arith.constant 0 : i32
    %c0_i32_0 = arith.constant 0 : i32
    %c0_i32_1 = arith.constant 0 : i32
    return %c0_i32, %c0_i32_0 : i32, i32
  }
  func.func @transform_12(%arg0: i32) -> (i32, i32) {
    %c0_i32 = arith.constant 0 : i32
    %c0_i32_0 = arith.constant 0 : i32
    %c0_i32_1 = arith.constant 0 : i32
    return %c0_i32, %c0_i32_0 : i32, i32
  }
  func.func @transform_13(%arg0: i32) -> (i32, i32) {
    %c0_i32 = arith.constant 0 : i32
    %c0_i32_0 = arith.constant 0 : i32
    %c0_i32_1 = arith.constant 0 : i32
    return %c0_i32, %c0_i32_0 : i32, i32
  }
  func.func @transform_14(%arg0: i32) -> (i32, i32) {
    %c0_i32 = arith.constant 0 : i32
    %c0_i32_0 = arith.constant 0 : i32
    return %arg0, %c0_i32 : i32, i32
  }
}

</mosaic_0001>

<llo_original>
// kernel: tpu_custom_call.1
$region0: #{tpu_custom_call.1}
  #allocation0 [shape = 'u32[]', space=smem, size = 0x4, offset = 0x4, fixed_abs, tag = 'smem constant byte address 0x4 - core index']
  #allocation1 [shape = 'u32[144,128]{1,0:T(1,128)}', space=vmem, size = 0x12000, scoped, tag = 'internal scratch']
  %s0 = inlined_call_operand.vmem [shape: f32[16,16], index: 0, kind: input, shape index: {}]
  %s1 = inlined_call_operand.vmem [shape: f32[16,16], index: 1, kind: input, shape index: {}]
  %s2 = inlined_call_operand.vmem [shape: f32[256,8], index: 2, kind: input, shape index: {}]
  %s3 = inlined_call_operand.vmem [shape: f32[16,16], index: 3, kind: input, shape index: {}]
  %s4 = inlined_call_operand.vmem [shape: f32[16,64], index: 4, kind: input, shape index: {}]
  %s5 = inlined_call_operand.vmem [shape: f32[1,64], index: 5, kind: input, shape index: {}]
  %s6 = inlined_call_operand.vmem [shape: f32[8,32], index: 6, kind: input, shape index: {}]
  %s7 = inlined_call_operand.vmem [shape: f32[1,65], index: 7, kind: input, shape index: {}]
  %s8 = inlined_call_operand.vmem [shape: f32[32,32], index: 8, kind: input, shape index: {}]
  %s9 = inlined_call_operand.vmem [shape: f32[1,32], index: 9, kind: input, shape index: {}]
  %s10 = inlined_call_operand.vmem [shape: f32[32,96], index: 10, kind: input, shape index: {}]
  %s11 = inlined_call_operand.vmem [shape: f32[1,96], index: 11, kind: input, shape index: {}]
  %s12 = inlined_call_operand.vmem [shape: f32[32,96], index: 12, kind: input, shape index: {}]
  %s13 = inlined_call_operand.vmem [shape: f32[1,96], index: 13, kind: input, shape index: {}]
  %s14 = inlined_call_operand.hbm [shape: f32[16,32], index: 14, kind: output, shape index: {}]
  %s15 = sld [smem:[#allocation0]]
  $region89: #{tpu_custom_call.1} parent=0
    _
  %s17 = ssub.s32 1, %s15
  %s18 = scalar_select 0, %s17, %s15
  $region1: #{tpu_custom_call.1} parent=0
    #allocation2 [shape = 'u8[8192]{0}', space=vmem, size = 0x2000, scoped, tag = 'output window, operand 0']
    #allocation3 [shape = 's32[2]{0}', space=sflag, size = 0x8, scoped, tag = 'scoped memory for tpu_custom_call.1']
    %19 = vsyncpa [#allocation3], 0
    %s20 = scalar_lea.sflag [#allocation3], 1
    %21 = vsyncpa %s20, 0
    loop: start=0, step=1, limit=4
    $region2: #{tpu_custom_call.1} parent=1 // loop_pre_header
      _
    $region3: #{tpu_custom_call.1} parent=1 // loop_header
      %s23 = sphi 0, %s27
      %p24 = scmp.ge.s32.totalorder %s23, 4
      %s31 = sphi 0, %s31
      %s33 = sphi 0, %s31
      %s34 = sphi 0, %s33
      %s48 = sphi 0, %s34
      %s54 = sphi 0, %s56
      %s57 = sphi 0, %s54
      %s58 = sphi 0, %s57
      %s74 = sphi 0, %s58
      %s80 = sphi 0, %s82
      %s83 = sphi 0, %s80
      %s84 = sphi 0, %s83
      %s100 = sphi 0, %s84
      %s106 = sphi 0, %s108
      %s109 = sphi 0, %s106
      %s110 = sphi 0, %s109
      %s126 = sphi 0, %s110
      %s130 = sphi 0, %s130
      %s132 = sphi 0, %s130
      %s133 = sphi 0, %s132
      %s147 = sphi 0, %s133
      %s151 = sphi 0, %s151
      %s153 = sphi 0, %s151
      %s154 = sphi 0, %s153
      %s168 = sphi 0, %s154
      %s172 = sphi 0, %s172
      %s174 = sphi 0, %s172
      %s175 = sphi 0, %s174
      %s189 = sphi 0, %s175
      %s193 = sphi 0, %s193
      %s195 = sphi 0, %s193
      %s196 = sphi 0, %s195
      %s210 = sphi 0, %s196
      %s214 = sphi 0, %s214
      %s216 = sphi 0, %s214
      %s217 = sphi 0, %s216
      %s231 = sphi 0, %s217
      %s235 = sphi 0, %s235
      %s237 = sphi 0, %s235
      %s238 = sphi 0, %s237
      %s252 = sphi 0, %s238
      %s256 = sphi 0, %s256
      %s258 = sphi 0, %s256
      %s259 = sphi 0, %s258
      %s273 = sphi 0, %s259
      %s277 = sphi 0, %s277
      %s279 = sphi 0, %s277
      %s280 = sphi 0, %s279
      %s294 = sphi 0, %s280
      %s298 = sphi 0, %s298
      %s300 = sphi 0, %s298
      %s301 = sphi 0, %s300
      %s315 = sphi 0, %s301
      %s319 = sphi 0, %s319
      %s321 = sphi 0, %s319
      %s322 = sphi 0, %s321
      %s336 = sphi 0, %s322
      %s342 = sphi 0, %s344
      %s345 = sphi 0, %s342
      %s346 = sphi 0, %s345
      %s362 = sphi 0, %s346
    $region4: #{tpu_custom_call.1} parent=1 // loop_header_branch
      %26 = sbr.rel (%p24) target = $region8
    $region5: #{tpu_custom_call.1} parent=1 // loop_body
      %s28 = ssub.s32 %s23, 1
      %s29 = ssub.s32 %s23, 2
      %s30 = sadd.s32 %s23, 1
      %s32 = sadd.s32 %s31, 1
      %p35 = scmp.eq.s32.totalorder %s23, 1
      %p36 = scmp.ne.s32.totalorder %s31, %s33
      %p37 = scmp.eq.s32.totalorder %s23, 0
      %p38 = por %p36, %p37
      %p39 = scmp.ne.s32.totalorder %s31, %s33
      %p40 = scmp.eq.s32.totalorder %s28, 1
      %p41 = por %p39, %p40
      %p42 = scmp.ne.s32.totalorder %s33, %s34
      %p43 = scmp.eq.s32.totalorder %s28, 0
      %p44 = por %p42, %p43
      %p45 = scmp.ne.s32.totalorder %s33, %s34
      %p46 = scmp.eq.s32.totalorder %s29, 1
      %p47 = por %p45, %p46
      %p49 = scmp.ne.s32.totalorder %s34, %s48
      %p50 = scmp.eq.s32.totalorder %s29, 0
      %p51 = por %p49, %p50
      %s52 = ssub.s32 %s23, %s30
      %p53 = scmp.eq.s32.totalorder %s52, 0
      %s55 = sadd.s32 %s54, 1
      %s56 = scalar_select %p53, %s54, %s55
      %p59 = pneg %p53
      %p60 = scmp.eq.s32.totalorder %s23, 1
      %p61 = por %p59, %p60
      %p62 = scmp.ne.s32.totalorder %s54, %s57
      %p63 = scmp.eq.s32.totalorder %s23, 0
      %p64 = por %p62, %p63
      %p65 = scmp.ne.s32.totalorder %s54, %s57
      %p66 = scmp.eq.s32.totalorder %s28, 1
      %p67 = por %p65, %p66
      %p68 = scmp.ne.s32.totalorder %s57, %s58
      %p69 = scmp.eq.s32.totalorder %s28, 0
      %p70 = por %p68, %p69
      %p71 = scmp.ne.s32.totalorder %s57, %s58
      %p72 = scmp.eq.s32.totalorder %s29, 1
      %p73 = por %p71, %p72
      %p75 = scmp.ne.s32.totalorder %s58, %s74
      %p76 = scmp.eq.s32.totalorder %s29, 0
      %p77 = por %p75, %p76
      %s78 = ssub.s32 %s23, %s30
      %p79 = scmp.eq.s32.totalorder %s78, 0
      %s81 = sadd.s32 %s80, 1
      %s82 = scalar_select %p79, %s80, %s81
      %p85 = pneg %p79
      %p86 = scmp.eq.s32.totalorder %s23, 1
      %p87 = por %p85, %p86
      %p88 = scmp.ne.s32.totalorder %s80, %s83
      %p89 = scmp.eq.s32.totalorder %s23, 0
      %p90 = por %p88, %p89
      %p91 = scmp.ne.s32.totalorder %s80, %s83
      %p92 = scmp.eq.s32.totalorder %s28, 1
      %p93 = por %p91, %p92
      %p94 = scmp.ne.s32.totalorder %s83, %s84
      %p95 = scmp.eq.s32.totalorder %s28, 0
      %p96 = por %p94, %p95
      %p97 = scmp.ne.s32.totalorder %s83, %s84
      %p98 = scmp.eq.s32.totalorder %s29, 1
      %p99 = por %p97, %p98
      %p101 = scmp.ne.s32.totalorder %s84, %s100
      %p102 = scmp.eq.s32.totalorder %s29, 0
      %p103 = por %p101, %p102
      %s104 = ssub.s32 %s23, %s30
      %p105 = scmp.eq.s32.totalorder %s104, 0
      %s107 = sadd.s32 %s106, 1
      %s108 = scalar_select %p105, %s106, %s107
      %p111 = pneg %p105
      %p112 = scmp.eq.s32.totalorder %s23, 1
      %p113 = por %p111, %p112
      %p114 = scmp.ne.s32.totalorder %s106, %s109
      %p115 = scmp.eq.s32.totalorder %s23, 0
      %p116 = por %p114, %p115
      %p117 = scmp.ne.s32.totalorder %s106, %s109
      %p118 = scmp.eq.s32.totalorder %s28, 1
      %p119 = por %p117, %p118
      %p120 = scmp.ne.s32.totalorder %s109, %s110
      %p121 = scmp.eq.s32.totalorder %s28, 0
      %p122 = por %p120, %p121
      %p123 = scmp.ne.s32.totalorder %s109, %s110
      %p124 = scmp.eq.s32.totalorder %s29, 1
      %p125 = por %p123, %p124
      %p127 = scmp.ne.s32.totalorder %s110, %s126
      %p128 = scmp.eq.s32.totalorder %s29, 0
      %p129 = por %p127, %p128
      %s131 = sadd.s32 %s130, 1
      %p134 = scmp.eq.s32.totalorder %s23, 1
      %p135 = scmp.ne.s32.totalorder %s130, %s132
      %p136 = scmp.eq.s32.totalorder %s23, 0
      %p137 = por %p135, %p136
      %p138 = scmp.ne.s32.totalorder %s130, %s132
      %p139 = scmp.eq.s32.totalorder %s28, 1
      %p140 = por %p138, %p139
      %p141 = scmp.ne.s32.totalorder %s132, %s133
      %p142 = scmp.eq.s32.totalorder %s28, 0
      %p143 = por %p141, %p142
      %p144 = scmp.ne.s32.totalorder %s132, %s133
      %p145 = scmp.eq.s32.totalorder %s29, 1
      %p146 = por %p144, %p145
      %p148 = scmp.ne.s32.totalorder %s133, %s147
      %p149 = scmp.eq.s32.totalorder %s29, 0
      %p150 = por %p148, %p149
      %s152 = sadd.s32 %s151, 1
      %p155 = scmp.eq.s32.totalorder %s23, 1
      %p156 = scmp.ne.s32.totalorder %s151, %s153
      %p157 = scmp.eq.s32.totalorder %s23, 0
      %p158 = por %p156, %p157
      %p159 = scmp.ne.s32.totalorder %s151, %s153
      %p160 = scmp.eq.s32.totalorder %s28, 1
      %p161 = por %p159, %p160
      %p162 = scmp.ne.s32.totalorder %s153, %s154
      %p163 = scmp.eq.s32.totalorder %s28, 0
      %p164 = por %p162, %p163
      %p165 = scmp.ne.s32.totalorder %s153, %s154
      %p166 = scmp.eq.s32.totalorder %s29, 1
      %p167 = por %p165, %p166
      %p169 = scmp.ne.s32.totalorder %s154, %s168
      %p170 = scmp.eq.s32.totalorder %s29, 0
      %p171 = por %p169, %p170
      %s173 = sadd.s32 %s172, 1
      %p176 = scmp.eq.s32.totalorder %s23, 1
      %p177 = scmp.ne.s32.totalorder %s172, %s174
      %p178 = scmp.eq.s32.totalorder %s23, 0
      %p179 = por %p177, %p178
      %p180 = scmp.ne.s32.totalorder %s172, %s174
      %p181 = scmp.eq.s32.totalorder %s28, 1
      %p182 = por %p180, %p181
      %p183 = scmp.ne.s32.totalorder %s174, %s175
      %p184 = scmp.eq.s32.totalorder %s28, 0
      %p185 = por %p183, %p184
      %p186 = scmp.ne.s32.totalorder %s174, %s175
      %p187 = scmp.eq.s32.totalorder %s29, 1
      %p188 = por %p186, %p187
      %p190 = scmp.ne.s32.totalorder %s175, %s189
      %p191 = scmp.eq.s32.totalorder %s29, 0
      %p192 = por %p190, %p191
      %s194 = sadd.s32 %s193, 1
      %p197 = scmp.eq.s32.totalorder %s23, 1
      %p198 = scmp.ne.s32.totalorder %s193, %s195
      %p199 = scmp.eq.s32.totalorder %s23, 0
      %p200 = por %p198, %p199
      %p201 = scmp.ne.s32.totalorder %s193, %s195
      %p202 = scmp.eq.s32.totalorder %s28, 1
      %p203 = por %p201, %p202
      %p204 = scmp.ne.s32.totalorder %s195, %s196
      %p205 = scmp.eq.s32.totalorder %s28, 0
      %p206 = por %p204, %p205
      %p207 = scmp.ne.s32.totalorder %s195, %s196
      %p208 = scmp.eq.s32.totalorder %s29, 1
      %p209 = por %p207, %p208
      %p211 = scmp.ne.s32.totalorder %s196, %s210
      %p212 = scmp.eq.s32.totalorder %s29, 0
      %p213 = por %p211, %p212
      %s215 = sadd.s32 %s214, 1
      %p218 = scmp.eq.s32.totalorder %s23, 1
      %p219 = scmp.ne.s32.totalorder %s214, %s216
      %p220 = scmp.eq.s32.totalorder %s23, 0
      %p221 = por %p219, %p220
      %p222 = scmp.ne.s32.totalorder %s214, %s216
      %p223 = scmp.eq.s32.totalorder %s28, 1
      %p224 = por %p222, %p223
      %p225 = scmp.ne.s32.totalorder %s216, %s217
      %p226 = scmp.eq.s32.totalorder %s28, 0
      %p227 = por %p225, %p226
      %p228 = scmp.ne.s32.totalorder %s216, %s217
      %p229 = scmp.eq.s32.totalorder %s29, 1
      %p230 = por %p228, %p229
      %p232 = scmp.ne.s32.totalorder %s217, %s231
      %p233 = scmp.eq.s32.totalorder %s29, 0
      %p234 = por %p232, %p233
      %s236 = sadd.s32 %s235, 1
      %p239 = scmp.eq.s32.totalorder %s23, 1
      %p240 = scmp.ne.s32.totalorder %s235, %s237
      %p241 = scmp.eq.s32.totalorder %s23, 0
      %p242 = por %p240, %p241
      %p243 = scmp.ne.s32.totalorder %s235, %s237
      %p244 = scmp.eq.s32.totalorder %s28, 1
      %p245 = por %p243, %p244
      %p246 = scmp.ne.s32.totalorder %s237, %s238
      %p247 = scmp.eq.s32.totalorder %s28, 0
      %p248 = por %p246, %p247
      %p249 = scmp.ne.s32.totalorder %s237, %s238
      %p250 = scmp.eq.s32.totalorder %s29, 1
      %p251 = por %p249, %p250
      %p253 = scmp.ne.s32.totalorder %s238, %s252
      %p254 = scmp.eq.s32.totalorder %s29, 0
      %p255 = por %p253, %p254
      %s257 = sadd.s32 %s256, 1
      %p260 = scmp.eq.s32.totalorder %s23, 1
      %p261 = scmp.ne.s32.totalorder %s256, %s258
      %p262 = scmp.eq.s32.totalorder %s23, 0
      %p263 = por %p261, %p262
      %p264 = scmp.ne.s32.totalorder %s256, %s258
      %p265 = scmp.eq.s32.totalorder %s28, 1
      %p266 = por %p264, %p265
      %p267 = scmp.ne.s32.totalorder %s258, %s259
      %p268 = scmp.eq.s32.totalorder %s28, 0
      %p269 = por %p267, %p268
      %p270 = scmp.ne.s32.totalorder %s258, %s259
      %p271 = scmp.eq.s32.totalorder %s29, 1
      %p272 = por %p270, %p271
      %p274 = scmp.ne.s32.totalorder %s259, %s273
      %p275 = scmp.eq.s32.totalorder %s29, 0
      %p276 = por %p274, %p275
      %s278 = sadd.s32 %s277, 1
      %p281 = scmp.eq.s32.totalorder %s23, 1
      %p282 = scmp.ne.s32.totalorder %s277, %s279
      %p283 = scmp.eq.s32.totalorder %s23, 0
      %p284 = por %p282, %p283
      %p285 = scmp.ne.s32.totalorder %s277, %s279
      %p286 = scmp.eq.s32.totalorder %s28, 1
      %p287 = por %p285, %p286
      %p288 = scmp.ne.s32.totalorder %s279, %s280
      %p289 = scmp.eq.s32.totalorder %s28, 0
      %p290 = por %p288, %p289
      %p291 = scmp.ne.s32.totalorder %s279, %s280
      %p292 = scmp.eq.s32.totalorder %s29, 1
      %p293 = por %p291, %p292
      %p295 = scmp.ne.s32.totalorder %s280, %s294
      %p296 = scmp.eq.s32.totalorder %s29, 0
      %p297 = por %p295, %p296
      %s299 = sadd.s32 %s298, 1
      %p302 = scmp.eq.s32.totalorder %s23, 1
      %p303 = scmp.ne.s32.totalorder %s298, %s300
      %p304 = scmp.eq.s32.totalorder %s23, 0
      %p305 = por %p303, %p304
      %p306 = scmp.ne.s32.totalorder %s298, %s300
      %p307 = scmp.eq.s32.totalorder %s28, 1
      %p308 = por %p306, %p307
      %p309 = scmp.ne.s32.totalorder %s300, %s301
      %p310 = scmp.eq.s32.totalorder %s28, 0
      %p311 = por %p309, %p310
      %p312 = scmp.ne.s32.totalorder %s300, %s301
      %p313 = scmp.eq.s32.totalorder %s29, 1
      %p314 = por %p312, %p313
      %p316 = scmp.ne.s32.totalorder %s301, %s315
      %p317 = scmp.eq.s32.totalorder %s29, 0
      %p318 = por %p316, %p317
      %s320 = sadd.s32 %s319, 1
      %p323 = scmp.eq.s32.totalorder %s23, 1
      %p324 = scmp.ne.s32.totalorder %s319, %s321
      %p325 = scmp.eq.s32.totalorder %s23, 0
      %p326 = por %p324, %p325
      %p327 = scmp.ne.s32.totalorder %s319, %s321
      %p328 = scmp.eq.s32.totalorder %s28, 1
      %p329 = por %p327, %p328
      %p330 = scmp.ne.s32.totalorder %s321, %s322
      %p331 = scmp.eq.s32.totalorder %s28, 0
      %p332 = por %p330, %p331
      %p333 = scmp.ne.s32.totalorder %s321, %s322
      %p334 = scmp.eq.s32.totalorder %s29, 1
      %p335 = por %p333, %p334
      %p337 = scmp.ne.s32.totalorder %s322, %s336
      %p338 = scmp.eq.s32.totalorder %s29, 0
      %p339 = por %p337, %p338
      %s340 = ssub.s32 %s23, %s30
      %p341 = scmp.eq.s32.totalorder %s340, 0
      %s343 = sadd.s32 %s342, 1
      %s344 = scalar_select %p341, %s342, %s343
      %p347 = pneg %p341
      %p348 = scmp.eq.s32.totalorder %s23, 1
      %p349 = por %p347, %p348
      %p350 = scmp.ne.s32.totalorder %s342, %s345
      %p351 = scmp.eq.s32.totalorder %s23, 0
      %p352 = por %p350, %p351
      %p353 = scmp.ne.s32.totalorder %s342, %s345
      %p354 = scmp.eq.s32.totalorder %s28, 1
      %p355 = por %p353, %p354
      %p356 = scmp.ne.s32.totalorder %s345, %s346
      %p357 = scmp.eq.s32.totalorder %s28, 0
      %p358 = por %p356, %p357
      %p359 = scmp.ne.s32.totalorder %s345, %s346
      %p360 = scmp.eq.s32.totalorder %s29, 1
      %p361 = por %p359, %p360
      %p363 = scmp.ne.s32.totalorder %s346, %s362
      %p364 = scmp.eq.s32.totalorder %s29, 0
      %p365 = por %p363, %p364
      %p366 = scmp.le.s32.totalorder 1, %s23
      %p367 = scmp.lt.s32.totalorder %s23, 3
      %p368 = pnand %p366, %p367
      %p369 = pneg %p368
      // Predicated region
      $region9: #{tpu_custom_call.1} parent=5 // pred_check
        _
      $region10: #{tpu_custom_call.1} parent=5 // pred_check_branch
        %371 = sbr.rel (%p368) target = $region12
      $region11: #{tpu_custom_call.1} parent=5 // pred_region
        %s372 = ssub.s32 %s23, 1
        // Predicated region
        $region13: #{tpu_custom_call.1} parent=11 // pred_check
          %p373 = pneg %p44
        $region14: #{tpu_custom_call.1} parent=11 // pred_check_branch
          %375 = sbr.rel (%p373) target = $region16
        $region15: #{tpu_custom_call.1} parent=11 // pred_region
          _
        $region16: #{tpu_custom_call.1} parent=11 // pred_fallthru
          _
        // Predicated region
        $region17: #{tpu_custom_call.1} parent=11 // pred_check
          %p376 = pneg %p143
        $region18: #{tpu_custom_call.1} parent=11 // pred_check_branch
          %378 = sbr.rel (%p376) target = $region20
        $region19: #{tpu_custom_call.1} parent=11 // pred_region
          _
        $region20: #{tpu_custom_call.1} parent=11 // pred_fallthru
          _
        // Predicated region
        $region21: #{tpu_custom_call.1} parent=11 // pred_check
          %p379 = pneg %p164
        $region22: #{tpu_custom_call.1} parent=11 // pred_check_branch
          %381 = sbr.rel (%p379) target = $region24
        $region23: #{tpu_custom_call.1} parent=11 // pred_region
          _
        $region24: #{tpu_custom_call.1} parent=11 // pred_fallthru
          _
        // Predicated region
        $region25: #{tpu_custom_call.1} parent=11 // pred_check
          %p382 = pneg %p185
        $region26: #{tpu_custom_call.1} parent=11 // pred_check_branch
          %384 = sbr.rel (%p382) target = $region28
        $region27: #{tpu_custom_call.1} parent=11 // pred_region
          _
        $region28: #{tpu_custom_call.1} parent=11 // pred_fallthru
          _
        // Predicated region
        $region29: #{tpu_custom_call.1} parent=11 // pred_check
          %p385 = pneg %p206
        $region30: #{tpu_custom_call.1} parent=11 // pred_check_branch
          %387 = sbr.rel (%p385) target = $region32
        $region31: #{tpu_custom_call.1} parent=11 // pred_region
          _
        $region32: #{tpu_custom_call.1} parent=11 // pred_fallthru
          _
        // Predicated region
        $region33: #{tpu_custom_call.1} parent=11 // pred_check
          %p388 = pneg %p227
        $region34: #{tpu_custom_call.1} parent=11 // pred_check_branch
          %390 = sbr.rel (%p388) target = $region36
        $region35: #{tpu_custom_call.1} parent=11 // pred_region
          _
        $region36: #{tpu_custom_call.1} parent=11 // pred_fallthru
          _
        // Predicated region
        $region37: #{tpu_custom_call.1} parent=11 // pred_check
          %p391 = pneg %p248
        $region38: #{tpu_custom_call.1} parent=11 // pred_check_branch
          %393 = sbr.rel (%p391) target = $region40
        $region39: #{tpu_custom_call.1} parent=11 // pred_region
          _
        $region40: #{tpu_custom_call.1} parent=11 // pred_fallthru
          _
        // Predicated region
        $region41: #{tpu_custom_call.1} parent=11 // pred_check
          %p394 = pneg %p269
        $region42: #{tpu_custom_call.1} parent=11 // pred_check_branch
          %396 = sbr.rel (%p394) target = $region44
        $region43: #{tpu_custom_call.1} parent=11 // pred_region
          _
        $region44: #{tpu_custom_call.1} parent=11 // pred_fallthru
          _
        // Predicated region
        $region45: #{tpu_custom_call.1} parent=11 // pred_check
          %p397 = pneg %p290
        $region46: #{tpu_custom_call.1} parent=11 // pred_check_branch
          %399 = sbr.rel (%p397) target = $region48
        $region47: #{tpu_custom_call.1} parent=11 // pred_region
          _
        $region48: #{tpu_custom_call.1} parent=11 // pred_fallthru
          _
        // Predicated region
        $region49: #{tpu_custom_call.1} parent=11 // pred_check
          %p400 = pneg %p311
        $region50: #{tpu_custom_call.1} parent=11 // pred_check_branch
          %402 = sbr.rel (%p400) target = $region52
        $region51: #{tpu_custom_call.1} parent=11 // pred_region
          _
        $region52: #{tpu_custom_call.1} parent=11 // pred_fallthru
          _
        // Predicated region
        $region53: #{tpu_custom_call.1} parent=11 // pred_check
          %p403 = pneg %p332
        $region54: #{tpu_custom_call.1} parent=11 // pred_check_branch
          %405 = sbr.rel (%p403) target = $region56
        $region55: #{tpu_custom_call.1} parent=11 // pred_region
          _
        $region56: #{tpu_custom_call.1} parent=11 // pred_fallthru
          _
      $region12: #{tpu_custom_call.1} parent=5 // pred_fallthru
        _
      %p406 = scmp.lt.s32.totalorder %s23, 2
      // Predicated region
      $region57: #{tpu_custom_call.1} parent=5 // pred_check
        %p407 = pneg %p406
      $region58: #{tpu_custom_call.1} parent=5 // pred_check_branch
        %409 = sbr.rel (%p407) target = $region60
      $region59: #{tpu_custom_call.1} parent=5 // pred_region
        // Predicated region
        $region61: #{tpu_custom_call.1} parent=59 // pred_check
          %p410 = pneg %p64
        $region62: #{tpu_custom_call.1} parent=59 // pred_check_branch
          %412 = sbr.rel (%p410) target = $region64
        $region63: #{tpu_custom_call.1} parent=59 // pred_region
          %p413 = scmp.lt.s32.totalorder %s23, 1
          %s414 = scalar_select %p413, %s23, 1
          %s415 = smul.addr %s414, 8
          %s416 = scalar_lea.vmem %s1, %s415
        $region64: #{tpu_custom_call.1} parent=59 // pred_fallthru
          _
        // Predicated region
        $region65: #{tpu_custom_call.1} parent=59 // pred_check
          %p417 = pneg %p90
        $region66: #{tpu_custom_call.1} parent=59 // pred_check_branch
          %419 = sbr.rel (%p417) target = $region68
        $region67: #{tpu_custom_call.1} parent=59 // pred_region
          %s420 = smul.u32 16, %s23
          %p421 = scmp.lt.s32.totalorder %s420, 31
          %s422 = scalar_select %p421, %s420, 31
          %s423 = smul.addr %s422, 8
          %s424 = scalar_lea.vmem %s2, %s423
          %s425 = smul.u32 16, %s23
        $region68: #{tpu_custom_call.1} parent=59 // pred_fallthru
          _
        // Predicated region
        $region69: #{tpu_custom_call.1} parent=59 // pred_check
          %p426 = pneg %p116
        $region70: #{tpu_custom_call.1} parent=59 // pred_check_branch
          %428 = sbr.rel (%p426) target = $region72
        $region71: #{tpu_custom_call.1} parent=59 // pred_region
          %p429 = scmp.lt.s32.totalorder %s23, 1
          %s430 = scalar_select %p429, %s23, 1
          %s431 = smul.addr %s430, 8
          %s432 = scalar_lea.vmem %s3, %s431
        $region72: #{tpu_custom_call.1} parent=59 // pred_fallthru
          _
      $region60: #{tpu_custom_call.1} parent=5 // pred_fallthru
        _
      %p433 = scmp.le.s32.totalorder 1, %s23
      %p434 = scmp.lt.s32.totalorder %s23, 3
      %p435 = pnand %p433, %p434
      %p436 = pneg %p435
      // Predicated region
      $region73: #{tpu_custom_call.1} parent=5 // pred_check
        _
      $region74: #{tpu_custom_call.1} parent=5 // pred_check_branch
        %438 = sbr.rel (%p435) target = $region76
      $region75: #{tpu_custom_call.1} parent=5 // pred_region
        %s439 = ssub.s32 %s23, 1
        %p440 = pneg %p44
        %p441 = pneg %p41
        %p442 = scmp.lt.s32.totalorder %s28, 1
        %s443 = scalar_select %p442, %s28, 1
        %s444 = smul.addr %s443, 8
        %s445 = scalar_lea.vmem %s1, %s444
        %p446 = pneg %p70
        %p447 = pneg %p67
        %s448 = smul.u32 16, %s28
        %p449 = scmp.lt.s32.totalorder %s448, 31
        %s450 = scalar_select %p449, %s448, 31
        %s451 = smul.addr %s450, 8
        %s452 = scalar_lea.vmem %s2, %s451
        %p453 = pneg %p96
        %p454 = pneg %p93
        %p455 = scmp.lt.s32.totalorder %s28, 1
        %s456 = scalar_select %p455, %s28, 1
        %s457 = smul.addr %s456, 8
        %s458 = scalar_lea.vmem %s3, %s457
        %p459 = pneg %p122
        %p460 = pneg %p119
        %p461 = pneg %p143
        %p462 = pneg %p140
        %p463 = pneg %p164
        %p464 = pneg %p161
        %p465 = pneg %p185
        %p466 = pneg %p182
        %p467 = pneg %p206
        %p468 = pneg %p203
        %p469 = pneg %p227
        %p470 = pneg %p224
        %p471 = pneg %p248
        %p472 = pneg %p245
        %p473 = pneg %p269
        %p474 = pneg %p266
        %p475 = pneg %p290
        %p476 = pneg %p287
        %p477 = pneg %p311
        %p478 = pneg %p308
        %p479 = pneg %p332
        %p480 = pneg %p329
        %p481 = pneg %p358
        %p482 = pneg %p355
        %s483 = sand.u32 %s345, 1
        %s484 = scalar_lea.sflag [#allocation3], %s483
        %s485 = sand.u32 %s345, 1
        %s486 = smul.addr %s485, 8
        %s487 = scalar_lea.vmem [#allocation2], %s486
        %p488 = scmp.lt.s32.totalorder %s28, 1
        %s489 = scalar_select %p488, %s28, 1
        %s490 = smul.addr %s489, 8
        %s491 = scalar_lea.vmem %s1, %s490
        %s492 = smul.u32 16, %s28
        %p493 = scmp.lt.s32.totalorder %s492, 31
        %s494 = scalar_select %p493, %s492, 31
        %s495 = smul.addr %s494, 8
        %s496 = scalar_lea.vmem %s2, %s495
        %s497 = smul.u32 16, %s28
        %p498 = scmp.lt.s32.totalorder %s28, 1
        %s499 = scalar_select %p498, %s28, 1
        %s500 = smul.addr %s499, 8
        %s501 = scalar_lea.vmem %s3, %s500
        %v502 = vld [vmem:[%s0] sm:$0xff]
        %v503 = vld [vmem:[%s0 + $0x8] sm:$0xff]
        %v504 = vld [vmem:[%s501] sm:$0xff]
        %v505 = vld [vmem:[%s7] sm:$0x1]
        %v506 = vld [vmem:[%s4] sm:$0xff]
        %v507 = vld [vmem:[%s4 + $0x8] sm:$0xff]
        %v508 = vld [vmem:[%s5] sm:$0x1]
        %v510 = vlaneseq
        %v511 = vshrl.u32 %v510, 7
        %v512 = vsub.s32 0, %v511
        %v513 = vrot.slane %v508, %v512
        %vm515 = vcmask 130048
        %v517 = vsel %vm515, %v502, 0
        %v520 = vsel %vm515, %v503, 0
        %522 = vmatprep.subr.mxu0 0.0
        %523 = vmatpush1.msra.mxu0 %v506
        %524 = vmatprep.subr.mxu0 0.0
        %525 = vmatpush1.msra.mxu0 %v507
        %526 = vmatprep.subr.mxu0 0.0
        %527 = vmatpush1.msra.mxu0 0.0
        %528 = vmatprep.subr.mxu0 0.0
        %529 = vmatpush1.msra.mxu0 0.0
        %530 = vmatprep.subr.mxu0 0.0
        %531 = vmatpush1.msra.mxu0 0.0
        %532 = vmatprep.subr.mxu0 0.0
        %533 = vmatpush1.msra.mxu0 0.0
        %534 = vmatprep.subr.mxu0 0.0
        %535 = vmatpush1.msra.mxu0 0.0
        %536 = vmatprep.subr.mxu0 0.0
        %537 = vmatpush1.msra.mxu0 0.0
        %538 = vmatprep.subr.mxu0 0.0
        %539 = vmatpush1.msra.mxu0 0.0
        %540 = vmatprep.subr.mxu0 0.0
        %541 = vmatpush1.msra.mxu0 0.0
        %542 = vmatprep.subr.mxu0 0.0
        %543 = vmatpush1.msra.mxu0 0.0
        %544 = vmatprep.subr.mxu0 0.0
        %545 = vmatpush1.msra.mxu0 0.0
        %546 = vmatprep.subr.mxu0 0.0
        %547 = vmatpush1.msra.mxu0 0.0
        %548 = vmatprep.subr.mxu0 0.0
        %549 = vmatpush1.msra.mxu0 0.0
        %550 = vmatprep.subr.mxu0 0.0
        %551 = vmatpush1.msra.mxu0 0.0
        %552 = vmatprep.subr.mxu0 0.0
        %553 = vmatpush1.msra.mxu0 0.0
        %554 = vmatprep.subr.mxu0 0.0
        %555 = vmatpush1.msra.mxu0 0.0
        %556 = vmatprep.subr.mxu0 0.0
        %557 = vmatpush1.msra.mxu0 0.0
        %558 = vmatprep.subr.mxu0 0.0
        %559 = vmatpush1.msra.mxu0 0.0
        %560 = vmatprep.subr.mxu0 0.0
        %561 = vmatpush1.msra.mxu0 0.0
        %562 = vmatprep.subr.mxu0 0.0
        %563 = vmatpush1.msra.mxu0 0.0
        %564 = vmatprep.subr.mxu0 0.0
        %565 = vmatpush1.msra.mxu0 0.0
        %566 = vmatprep.subr.mxu0 0.0
        %567 = vmatpush1.msra.mxu0 0.0
        %568 = vmatprep.subr.mxu0 0.0
        %569 = vmatpush1.msra.mxu0 0.0
        %570 = vmatprep.subr.mxu0 0.0
        %571 = vmatpush1.msra.mxu0 0.0
        %572 = vmatprep.subr.mxu0 0.0
        %573 = vmatpush1.msra.mxu0 0.0
        %574 = vmatprep.subr.mxu0 0.0
        %575 = vmatpush1.msra.mxu0 0.0
        %576 = vmatprep.subr.mxu0 0.0
        %577 = vmatpush1.msra.mxu0 0.0
        %578 = vmatprep.subr.mxu0 0.0
        %579 = vmatpush1.msra.mxu0 0.0
        %580 = vmatprep.subr.mxu0 0.0
        %581 = vmatpush1.msra.mxu0 0.0
        %582 = vmatprep.subr.mxu0 0.0
        %583 = vmatpush1.msra.mxu0 0.0
        %584 = vmatprep.subr.mxu0 0.0
        %585 = vmatpush1.msra.mxu0 0.0
        %586 = vmatprep.mubr.f32.mxu0 0.0
        %587 = vmatmul.mubr.f32.gmra.mrb[0].mxu0 %v517
        %v588 = vpop.f32.mrb[0].mxu0
        %v589 = vadd.f32 %v513, %v588
        %v590 = vpop.f32.mrb[0].mxu0
        %591 = vmatprep.mubr.f32.mxu0 0.0
        %592 = vmatmul.mubr.f32.gmra.mrb[0].mxu0 %v520
        %v593 = vpop.f32.mrb[0].mxu0
        %v594 = vadd.f32 %v513, %v593
        %v595 = vpop.f32.mrb[0].mxu0
        %596 = vdwg.mxu0
        %vm597 = vcmp.gt.f32.partialorder %v589, 0.0
        %vm598 = vcmp.gt.f32.partialorder %v594, 0.0
        %v599 = vmul.f32 %v589, 0.01
        %v600 = vmul.f32 %v594, 0.01
        %v601 = vsel %vm597, %v589, %v599
        %v602 = vsel %vm598, %v594, %v600
        %v603 = vld [vmem:[%s491] sm:$0xff]
        %v605 = vsel %vm515, %v603, 0
        %607 = vmatprep.subr.mxu0 0.0
        %608 = vmatpush1.msra.mxu0 %v506
        %609 = vmatprep.subr.mxu0 0.0
        %610 = vmatpush1.msra.mxu0 %v507
        %611 = vmatprep.subr.mxu0 0.0
        %612 = vmatpush1.msra.mxu0 0.0
        %613 = vmatprep.subr.mxu0 0.0
        %614 = vmatpush1.msra.mxu0 0.0
        %615 = vmatprep.subr.mxu0 0.0
        %616 = vmatpush1.msra.mxu0 0.0
        %617 = vmatprep.subr.mxu0 0.0
        %618 = vmatpush1.msra.mxu0 0.0
        %619 = vmatprep.subr.mxu0 0.0
        %620 = vmatpush1.msra.mxu0 0.0
        %621 = vmatprep.subr.mxu0 0.0
        %622 = vmatpush1.msra.mxu0 0.0
        %623 = vmatprep.subr.mxu0 0.0
        %624 = vmatpush1.msra.mxu0 0.0
        %625 = vmatprep.subr.mxu0 0.0
        %626 = vmatpush1.msra.mxu0 0.0
        %627 = vmatprep.subr.mxu0 0.0
        %628 = vmatpush1.msra.mxu0 0.0
        %629 = vmatprep.subr.mxu0 0.0
        %630 = vmatpush1.msra.mxu0 0.0
        %631 = vmatprep.subr.mxu0 0.0
        %632 = vmatpush1.msra.mxu0 0.0
        %633 = vmatprep.subr.mxu0 0.0
        %634 = vmatpush1.msra.mxu0 0.0
        %635 = vmatprep.subr.mxu0 0.0
        %636 = vmatpush1.msra.mxu0 0.0
        %637 = vmatprep.subr.mxu0 0.0
        %638 = vmatpush1.msra.mxu0 0.0
        %639 = vmatprep.subr.mxu0 0.0
        %640 = vmatpush1.msra.mxu0 0.0
        %641 = vmatprep.subr.mxu0 0.0
        %642 = vmatpush1.msra.mxu0 0.0
        %643 = vmatprep.subr.mxu0 0.0
        %644 = vmatpush1.msra.mxu0 0.0
        %645 = vmatprep.subr.mxu0 0.0
        %646 = vmatpush1.msra.mxu0 0.0
        %647 = vmatprep.subr.mxu0 0.0
        %648 = vmatpush1.msra.mxu0 0.0
        %649 = vmatprep.subr.mxu0 0.0
        %650 = vmatpush1.msra.mxu0 0.0
        %651 = vmatprep.subr.mxu0 0.0
        %652 = vmatpush1.msra.mxu0 0.0
        %653 = vmatprep.subr.mxu0 0.0
        %654 = vmatpush1.msra.mxu0 0.0
        %655 = vmatprep.subr.mxu0 0.0
        %656 = vmatpush1.msra.mxu0 0.0
        %657 = vmatprep.subr.mxu0 0.0
        %658 = vmatpush1.msra.mxu0 0.0
        %659 = vmatprep.subr.mxu0 0.0
        %660 = vmatpush1.msra.mxu0 0.0
        %661 = vmatprep.subr.mxu0 0.0
        %662 = vmatpush1.msra.mxu0 0.0
        %663 = vmatprep.subr.mxu0 0.0
        %664 = vmatpush1.msra.mxu0 0.0
        %665 = vmatprep.subr.mxu0 0.0
        %666 = vmatpush1.msra.mxu0 0.0
        %667 = vmatprep.subr.mxu0 0.0
        %668 = vmatpush1.msra.mxu0 0.0
        %669 = vmatprep.subr.mxu0 0.0
        %670 = vmatpush1.msra.mxu0 0.0
        %671 = vmatprep.mubr.f32.mxu0 0.0
        %672 = vmatmul.mubr.f32.gmra.mrb[0].mxu0 %v605
        %v673 = vpop.f32.mrb[0].mxu0
        %v674 = vadd.f32 %v513, %v673
        %v675 = vpop.f32.mrb[0].mxu0
        %676 = vdwg.mxu0
        %vm677 = vcmp.gt.f32.partialorder %v674, 0.0
        %v678 = vmul.f32 %v674, 0.01
        %v679 = vsel %vm677, %v674, %v678
        %v680 = vld [vmem:[%s496] sm:$0xff]
        %v681 = vld [vmem:[%s496 + $0x8] sm:$0xff]
        %v682 = vld [vmem:[%s496 + $0x10] sm:$0xff]
        %v683 = vld [vmem:[%s496 + $0x18] sm:$0xff]
        %v684 = vld [vmem:[%s496 + $0x20] sm:$0xff]
        %v685 = vld [vmem:[%s496 + $0x28] sm:$0xff]
        %v686 = vld [vmem:[%s496 + $0x30] sm:$0xff]
        %v687 = vld [vmem:[%s496 + $0x38] sm:$0xff]
        %v688 = vld [vmem:[%s496 + $0x40] sm:$0xff]
        %v689 = vld [vmem:[%s496 + $0x48] sm:$0xff]
        %v690 = vld [vmem:[%s496 + $0x50] sm:$0xff]
        %v691 = vld [vmem:[%s496 + $0x58] sm:$0xff]
        %v692 = vld [vmem:[%s496 + $0x60] sm:$0xff]
        %v693 = vld [vmem:[%s496 + $0x68] sm:$0xff]
        %v694 = vld [vmem:[%s496 + $0x70] sm:$0xff]
        %v695 = vld [vmem:[%s496 + $0x78] sm:$0xff]
        %v696 = vld [vmem:[%s6] sm:$0xff]
        %vm697 = vcmask 64512
        %v699 = vsel %vm697, %v680, 0
        %v702 = vsel %vm697, %v681, 0
        %v705 = vsel %vm697, %v682, 0
        %v708 = vsel %vm697, %v683, 0
        %v711 = vsel %vm697, %v684, 0
        %v714 = vsel %vm697, %v685, 0
        %v717 = vsel %vm697, %v686, 0
        %v720 = vsel %vm697, %v687, 0
        %v723 = vsel %vm697, %v688, 0
        %v726 = vsel %vm697, %v689, 0
        %v729 = vsel %vm697, %v690, 0
        %v732 = vsel %vm697, %v691, 0
        %v735 = vsel %vm697, %v692, 0
        %v738 = vsel %vm697, %v693, 0
        %v741 = vsel %vm697, %v694, 0
        %v744 = vsel %vm697, %v695, 0
        %746 = vmatprep.subr.mxu0 0.0
        %747 = vmatpush1.msra.mxu0 %v696
        %748 = vmatprep.subr.mxu0 0.0
        %749 = vmatpush1.msra.mxu0 0.0
        %750 = vmatprep.subr.mxu0 0.0
        %751 = vmatpush1.msra.mxu0 0.0
        %752 = vmatprep.subr.mxu0 0.0
        %753 = vmatpush1.msra.mxu0 0.0
        %754 = vmatprep.subr.mxu0 0.0
        %755 = vmatpush1.msra.mxu0 0.0
        %756 = vmatprep.subr.mxu0 0.0
        %757 = vmatpush1.msra.mxu0 0.0
        %758 = vmatprep.subr.mxu0 0.0
        %759 = vmatpush1.msra.mxu0 0.0
        %760 = vmatprep.subr.mxu0 0.0
        %761 = vmatpush1.msra.mxu0 0.0
        %762 = vmatprep.subr.mxu0 0.0
        %763 = vmatpush1.msra.mxu0 0.0
        %764 = vmatprep.subr.mxu0 0.0
        %765 = vmatpush1.msra.mxu0 0.0
        %766 = vmatprep.subr.mxu0 0.0
        %767 = vmatpush1.msra.mxu0 0.0
        %768 = vmatprep.subr.mxu0 0.0
        %769 = vmatpush1.msra.mxu0 0.0
        %770 = vmatprep.subr.mxu0 0.0
        %771 = vmatpush1.msra.mxu0 0.0
        %772 = vmatprep.subr.mxu0 0.0
        %773 = vmatpush1.msra.mxu0 0.0
        %774 = vmatprep.subr.mxu0 0.0
        %775 = vmatpush1.msra.mxu0 0.0
        %776 = vmatprep.subr.mxu0 0.0
        %777 = vmatpush1.msra.mxu0 0.0
        %778 = vmatprep.subr.mxu0 0.0
        %779 = vmatpush1.msra.mxu0 0.0
        %780 = vmatprep.subr.mxu0 0.0
        %781 = vmatpush1.msra.mxu0 0.0
        %782 = vmatprep.subr.mxu0 0.0
        %783 = vmatpush1.msra.mxu0 0.0
        %784 = vmatprep.subr.mxu0 0.0
        %785 = vmatpush1.msra.mxu0 0.0
        %786 = vmatprep.subr.mxu0 0.0
        %787 = vmatpush1.msra.mxu0 0.0
        %788 = vmatprep.subr.mxu0 0.0
        %789 = vmatpush1.msra.mxu0 0.0
        %790 = vmatprep.subr.mxu0 0.0
        %791 = vmatpush1.msra.mxu0 0.0
        %792 = vmatprep.subr.mxu0 0.0
        %793 = vmatpush1.msra.mxu0 0.0
        %794 = vmatprep.subr.mxu0 0.0
        %795 = vmatpush1.msra.mxu0 0.0
        %796 = vmatprep.subr.mxu0 0.0
        %797 = vmatpush1.msra.mxu0 0.0
        %798 = vmatprep.subr.mxu0 0.0
        %799 = vmatpush1.msra.mxu0 0.0
        %800 = vmatprep.subr.mxu0 0.0
        %801 = vmatpush1.msra.mxu0 0.0
        %802 = vmatprep.subr.mxu0 0.0
        %803 = vmatpush1.msra.mxu0 0.0
        %804 = vmatprep.subr.mxu0 0.0
        %805 = vmatpush1.msra.mxu0 0.0
        %806 = vmatprep.subr.mxu0 0.0
        %807 = vmatpush1.msra.mxu0 0.0
        %808 = vmatprep.subr.mxu0 0.0
        %809 = vmatpush1.msra.mxu0 0.0
        %810 = vmatprep.mubr.f32.mxu0 0.0
        %811 = vmatmul.mubr.f32.gmra.mrb[0].mxu0 %v699
        %v812 = vpop.f32.mrb[0].mxu0
        %v813 = vadd.f32 0.0, %v812
        %v814 = vpop.f32.mrb[0].mxu0
        %815 = vmatprep.mubr.f32.mxu0 0.0
        %816 = vmatmul.mubr.f32.gmra.mrb[0].mxu0 %v702
        %v817 = vpop.f32.mrb[0].mxu0
        %v818 = vadd.f32 0.0, %v817
        %v819 = vpop.f32.mrb[0].mxu0
        %820 = vmatprep.mubr.f32.mxu0 0.0
        %821 = vmatmul.mubr.f32.gmra.mrb[0].mxu0 %v705
        %v822 = vpop.f32.mrb[0].mxu0
        %v823 = vadd.f32 0.0, %v822
        %v824 = vpop.f32.mrb[0].mxu0
        %825 = vmatprep.mubr.f32.mxu0 0.0
        %826 = vmatmul.mubr.f32.gmra.mrb[0].mxu0 %v708
        %v827 = vpop.f32.mrb[0].mxu0
        %v828 = vadd.f32 0.0, %v827
        %v829 = vpop.f32.mrb[0].mxu0
        %830 = vmatprep.mubr.f32.mxu0 0.0
        %831 = vmatmul.mubr.f32.gmra.mrb[0].mxu0 %v711
        %v832 = vpop.f32.mrb[0].mxu0
        %v833 = vadd.f32 0.0, %v832
        %v834 = vpop.f32.mrb[0].mxu0
        %835 = vmatprep.mubr.f32.mxu0 0.0
        %836 = vmatmul.mubr.f32.gmra.mrb[0].mxu0 %v714
        %v837 = vpop.f32.mrb[0].mxu0
        %v838 = vadd.f32 0.0, %v837
        %v839 = vpop.f32.mrb[0].mxu0
        %840 = vmatprep.mubr.f32.mxu0 0.0
        %841 = vmatmul.mubr.f32.gmra.mrb[0].mxu0 %v717
        %v842 = vpop.f32.mrb[0].mxu0
        %v843 = vadd.f32 0.0, %v842
        %v844 = vpop.f32.mrb[0].mxu0
        %845 = vmatprep.mubr.f32.mxu0 0.0
        %846 = vmatmul.mubr.f32.gmra.mrb[0].mxu0 %v720
        %v847 = vpop.f32.mrb[0].mxu0
        %v848 = vadd.f32 0.0, %v847
        %v849 = vpop.f32.mrb[0].mxu0
        %850 = vmatprep.mubr.f32.mxu0 0.0
        %851 = vmatmul.mubr.f32.gmra.mrb[0].mxu0 %v723
        %v852 = vpop.f32.mrb[0].mxu0
        %v853 = vadd.f32 0.0, %v852
        %v854 = vpop.f32.mrb[0].mxu0
        %855 = vmatprep.mubr.f32.mxu0 0.0
        %856 = vmatmul.mubr.f32.gmra.mrb[0].mxu0 %v726
        %v857 = vpop.f32.mrb[0].mxu0
        %v858 = vadd.f32 0.0, %v857
        %v859 = vpop.f32.mrb[0].mxu0
        %860 = vmatprep.mubr.f32.mxu0 0.0
        %861 = vmatmul.mubr.f32.gmra.mrb[0].mxu0 %v729
        %v862 = vpop.f32.mrb[0].mxu0
        %v863 = vadd.f32 0.0, %v862
        %v864 = vpop.f32.mrb[0].mxu0
        %865 = vmatprep.mubr.f32.mxu0 0.0
        %866 = vmatmul.mubr.f32.gmra.mrb[0].mxu0 %v732
        %v867 = vpop.f32.mrb[0].mxu0
        %v868 = vadd.f32 0.0, %v867
        %v869 = vpop.f32.mrb[0].mxu0
        %870 = vmatprep.mubr.f32.mxu0 0.0
        %871 = vmatmul.mubr.f32.gmra.mrb[0].mxu0 %v735
        %v872 = vpop.f32.mrb[0].mxu0
        %v873 = vadd.f32 0.0, %v872
        %v874 = vpop.f32.mrb[0].mxu0
        %875 = vmatprep.mubr.f32.mxu0 0.0
        %876 = vmatmul.mubr.f32.gmra.mrb[0].mxu0 %v738
        %v877 = vpop.f32.mrb[0].mxu0
        %v878 = vadd.f32 0.0, %v877
        %v879 = vpop.f32.mrb[0].mxu0
        %880 = vmatprep.mubr.f32.mxu0 0.0
        %881 = vmatmul.mubr.f32.gmra.mrb[0].mxu0 %v741
        %v882 = vpop.f32.mrb[0].mxu0
        %v883 = vadd.f32 0.0, %v882
        %v884 = vpop.f32.mrb[0].mxu0
        %885 = vmatprep.mubr.f32.mxu0 0.0
        %886 = vmatmul.mubr.f32.gmra.mrb[0].mxu0 %v744
        %v887 = vpop.f32.mrb[0].mxu0
        %v888 = vadd.f32 0.0, %v887
        %v889 = vpop.f32.mrb[0].mxu0
        %890 = vdwg.mxu0
        %893 = vrot.lane.b32.xlu0 %v589, 96
        %v894 = vpop.permute.xlu0 %893
        %895 = vrot.lane.b32.xlu0 %v594, 96
        %v896 = vpop.permute.xlu0 %895
        %v899 = vadd.f32 %v813, %v894
        %v900 = vadd.f32 %v818, %v896
        %v901 = vadd.f32 %v823, %v894
        %v902 = vadd.f32 %v828, %v896
        %v903 = vadd.f32 %v833, %v894
        %v904 = vadd.f32 %v838, %v896
        %v905 = vadd.f32 %v843, %v894
        %v906 = vadd.f32 %v848, %v896
        %v907 = vadd.f32 %v853, %v894
        %v908 = vadd.f32 %v858, %v896
        %v909 = vadd.f32 %v863, %v894
        %v910 = vadd.f32 %v868, %v896
        %v911 = vadd.f32 %v873, %v894
        %v912 = vadd.f32 %v878, %v896
        %v913 = vadd.f32 %v883, %v894
        %v914 = vadd.f32 %v888, %v896
        %vm915 = vcmp.gt.f32.partialorder %v899, 0.0
        %vm916 = vcmp.gt.f32.partialorder %v900, 0.0
        %vm917 = vcmp.gt.f32.partialorder %v901, 0.0
        %vm918 = vcmp.gt.f32.partialorder %v902, 0.0
        %vm919 = vcmp.gt.f32.partialorder %v903, 0.0
        %vm920 = vcmp.gt.f32.partialorder %v904, 0.0
        %vm921 = vcmp.gt.f32.partialorder %v905, 0.0
        %vm922 = vcmp.gt.f32.partialorder %v906, 0.0
        %vm923 = vcmp.gt.f32.partialorder %v907, 0.0
        %vm924 = vcmp.gt.f32.partialorder %v908, 0.0
        %vm925 = vcmp.gt.f32.partialorder %v909, 0.0
        %vm926 = vcmp.gt.f32.partialorder %v910, 0.0
        %vm927 = vcmp.gt.f32.partialorder %v911, 0.0
        %vm928 = vcmp.gt.f32.partialorder %v912, 0.0
        %vm929 = vcmp.gt.f32.partialorder %v913, 0.0
        %vm930 = vcmp.gt.f32.partialorder %v914, 0.0
        %v931 = vmul.f32 %v899, 0.01
        %v932 = vmul.f32 %v900, 0.01
        %v933 = vmul.f32 %v901, 0.01
        %v934 = vmul.f32 %v902, 0.01
        %v935 = vmul.f32 %v903, 0.01
        %v936 = vmul.f32 %v904, 0.01
        %v937 = vmul.f32 %v905, 0.01
        %v938 = vmul.f32 %v906, 0.01
        %v939 = vmul.f32 %v907, 0.01
        %v940 = vmul.f32 %v908, 0.01
        %v941 = vmul.f32 %v909, 0.01
        %v942 = vmul.f32 %v910, 0.01
        %v943 = vmul.f32 %v911, 0.01
        %v944 = vmul.f32 %v912, 0.01
        %v945 = vmul.f32 %v913, 0.01
        %v946 = vmul.f32 %v914, 0.01
        %v947 = vsel %vm915, %v899, %v931
        %v948 = vsel %vm916, %v900, %v932
        %v949 = vsel %vm917, %v901, %v933
        %v950 = vsel %vm918, %v902, %v934
        %v951 = vsel %vm919, %v903, %v935
        %v952 = vsel %vm920, %v904, %v936
        %v953 = vsel %vm921, %v905, %v937
        %v954 = vsel %vm922, %v906, %v938
        %v955 = vsel %vm923, %v907, %v939
        %v956 = vsel %vm924, %v908, %v940
        %v957 = vsel %vm925, %v909, %v941
        %v958 = vsel %vm926, %v910, %v942
        %v959 = vsel %vm927, %v911, %v943
        %v960 = vsel %vm928, %v912, %v944
        %v961 = vsel %vm929, %v913, %v945
        %v962 = vsel %vm930, %v914, %v946
        %v964 = vlaneseq
        %v965 = vshrl.u32 %v964, 7
        %v966 = vsub.s32 0, %v965
        %v967 = vrot.slane %v505, %v966
        %v969 = vmul.f32 %v947, %v967
        %v970 = vmul.f32 %v948, %v967
        %v971 = vmul.f32 %v949, %v967
        %v972 = vmul.f32 %v950, %v967
        %v973 = vmul.f32 %v951, %v967
        %v974 = vmul.f32 %v952, %v967
        %v975 = vmul.f32 %v953, %v967
        %v976 = vmul.f32 %v954, %v967
        %v977 = vmul.f32 %v955, %v967
        %v978 = vmul.f32 %v956, %v967
        %v979 = vmul.f32 %v957, %v967
        %v980 = vmul.f32 %v958, %v967
        %v981 = vmul.f32 %v959, %v967
        %v982 = vmul.f32 %v960, %v967
        %v983 = vmul.f32 %v961, %v967
        %v984 = vmul.f32 %v962, %v967
        %vm985 = vcmask 261120
        %v986 = vsel %vm985, %v969, 0.0
        %987 = vadd.xlane.f32.xlu0 %v986
        %v988 = vpop.xlane.xlu0 %987
        %v989 = vsel %vm985, %v970, 0.0
        %990 = vadd.xlane.f32.xlu0 %v989
        %v991 = vpop.xlane.xlu0 %990
        %v992 = vsel %vm985, %v971, 0.0
        %993 = vadd.xlane.f32.xlu0 %v992
        %v994 = vpop.xlane.xlu0 %993
        %v995 = vsel %vm985, %v972, 0.0
        %996 = vadd.xlane.f32.xlu0 %v995
        %v997 = vpop.xlane.xlu0 %996
        %v998 = vsel %vm985, %v973, 0.0
        %999 = vadd.xlane.f32.xlu0 %v998
        %v1000 = vpop.xlane.xlu0 %999
        %v1001 = vsel %vm985, %v974, 0.0
        %1002 = vadd.xlane.f32.xlu0 %v1001
        %v1003 = vpop.xlane.xlu0 %1002
        %v1004 = vsel %vm985, %v975, 0.0
        %1005 = vadd.xlane.f32.xlu0 %v1004
        %v1006 = vpop.xlane.xlu0 %1005
        %v1007 = vsel %vm985, %v976, 0.0
        %1008 = vadd.xlane.f32.xlu0 %v1007
        %v1009 = vpop.xlane.xlu0 %1008
        %v1010 = vsel %vm985, %v977, 0.0
        %1011 = vadd.xlane.f32.xlu0 %v1010
        %v1012 = vpop.xlane.xlu0 %1011
        %v1013 = vsel %vm985, %v978, 0.0
        %1014 = vadd.xlane.f32.xlu0 %v1013
        %v1015 = vpop.xlane.xlu0 %1014
        %v1016 = vsel %vm985, %v979, 0.0
        %1017 = vadd.xlane.f32.xlu0 %v1016
        %v1018 = vpop.xlane.xlu0 %1017
        %v1019 = vsel %vm985, %v980, 0.0
        %1020 = vadd.xlane.f32.xlu0 %v1019
        %v1021 = vpop.xlane.xlu0 %1020
        %v1022 = vsel %vm985, %v981, 0.0
        %1023 = vadd.xlane.f32.xlu0 %v1022
        %v1024 = vpop.xlane.xlu0 %1023
        %v1025 = vsel %vm985, %v982, 0.0
        %1026 = vadd.xlane.f32.xlu0 %v1025
        %v1027 = vpop.xlane.xlu0 %1026
        %v1028 = vsel %vm985, %v983, 0.0
        %1029 = vadd.xlane.f32.xlu0 %v1028
        %v1030 = vpop.xlane.xlu0 %1029
        %v1031 = vsel %vm985, %v984, 0.0
        %1032 = vadd.xlane.f32.xlu0 %v1031
        %v1033 = vpop.xlane.xlu0 %1032
        %1034 = vrot.lane.b32.xlu0 %v967, 96
        %v1035 = vpop.permute.xlu0 %1034
        %v1037 = vmul.f32 %v601, %v1035
        %v1038 = vmul.f32 %v602, %v1035
        %v1039 = vsel %vm985, %v1037, 0.0
        %1040 = vadd.xlane.f32.xlu0 %v1039
        %v1041 = vpop.xlane.xlu0 %1040
        %v1042 = vsel %vm985, %v1038, 0.0
        %1043 = vadd.xlane.f32.xlu0 %v1042
        %v1044 = vpop.xlane.xlu0 %1043
        %v1045 = vadd.f32 %v1041, %v967
        %v1046 = vadd.f32 %v1044, %v967
        %v1047 = vadd.f32 %v988, %v1045
        %v1048 = vadd.f32 %v991, %v1046
        %v1049 = vadd.f32 %v994, %v1045
        %v1050 = vadd.f32 %v997, %v1046
        %v1051 = vadd.f32 %v1000, %v1045
        %v1052 = vadd.f32 %v1003, %v1046
        %v1053 = vadd.f32 %v1006, %v1045
        %v1054 = vadd.f32 %v1009, %v1046
        %v1055 = vadd.f32 %v1012, %v1045
        %v1056 = vadd.f32 %v1015, %v1046
        %v1057 = vadd.f32 %v1018, %v1045
        %v1058 = vadd.f32 %v1021, %v1046
        %v1059 = vadd.f32 %v1024, %v1045
        %v1060 = vadd.f32 %v1027, %v1046
        %v1061 = vadd.f32 %v1030, %v1045
        %v1062 = vadd.f32 %v1033, %v1046
        %vm1063 = vcmp.gt.f32.partialorder %v1047, 0.0
        %vm1064 = vcmp.gt.f32.partialorder %v1048, 0.0
        %vm1065 = vcmp.gt.f32.partialorder %v1049, 0.0
        %vm1066 = vcmp.gt.f32.partialorder %v1050, 0.0
        %vm1067 = vcmp.gt.f32.partialorder %v1051, 0.0
        %vm1068 = vcmp.gt.f32.partialorder %v1052, 0.0
        %vm1069 = vcmp.gt.f32.partialorder %v1053, 0.0
        %vm1070 = vcmp.gt.f32.partialorder %v1054, 0.0
        %vm1071 = vcmp.gt.f32.partialorder %v1055, 0.0
        %vm1072 = vcmp.gt.f32.partialorder %v1056, 0.0
        %vm1073 = vcmp.gt.f32.partialorder %v1057, 0.0
        %vm1074 = vcmp.gt.f32.partialorder %v1058, 0.0
        %vm1075 = vcmp.gt.f32.partialorder %v1059, 0.0
        %vm1076 = vcmp.gt.f32.partialorder %v1060, 0.0
        %vm1077 = vcmp.gt.f32.partialorder %v1061, 0.0
        %vm1078 = vcmp.gt.f32.partialorder %v1062, 0.0
        %v1079 = vmul.f32 %v1047, 0.01
        %v1080 = vmul.f32 %v1048, 0.01
        %v1081 = vmul.f32 %v1049, 0.01
        %v1082 = vmul.f32 %v1050, 0.01
        %v1083 = vmul.f32 %v1051, 0.01
        %v1084 = vmul.f32 %v1052, 0.01
        %v1085 = vmul.f32 %v1053, 0.01
        %v1086 = vmul.f32 %v1054, 0.01
        %v1087 = vmul.f32 %v1055, 0.01
        %v1088 = vmul.f32 %v1056, 0.01
        %v1089 = vmul.f32 %v1057, 0.01
        %v1090 = vmul.f32 %v1058, 0.01
        %v1091 = vmul.f32 %v1059, 0.01
        %v1092 = vmul.f32 %v1060, 0.01
        %v1093 = vmul.f32 %v1061, 0.01
        %v1094 = vmul.f32 %v1062, 0.01
        %v1095 = vsel %vm1063, %v1047, %v1079
        %v1096 = vsel %vm1064, %v1048, %v1080
        %v1097 = vsel %vm1065, %v1049, %v1081
        %v1098 = vsel %vm1066, %v1050, %v1082
        %v1099 = vsel %vm1067, %v1051, %v1083
        %v1100 = vsel %vm1068, %v1052, %v1084
        %v1101 = vsel %vm1069, %v1053, %v1085
        %v1102 = vsel %vm1070, %v1054, %v1086
        %v1103 = vsel %vm1071, %v1055, %v1087
        %v1104 = vsel %vm1072, %v1056, %v1088
        %v1105 = vsel %vm1073, %v1057, %v1089
        %v1106 = vsel %vm1074, %v1058, %v1090
        %v1107 = vsel %vm1075, %v1059, %v1091
        %v1108 = vsel %vm1076, %v1060, %v1092
        %v1109 = vsel %vm1077, %v1061, %v1093
        %v1110 = vsel %vm1078, %v1062, %v1094
        %vm1111 = vcmp.gt.f32.partialorder %v504, 0.0
        %1128 = vset.pattern.permute.xlu0 64
        %1129 = vperm.xlu0 %1128, %v1095
        %v1130 = vpop.permute.xlu0 %1129
        %1131 = vset.pattern.permute.xlu0 64
        %1132 = vperm.xlu0 %1131, %v1096
        %v1133 = vpop.permute.xlu0 %1132
        %1134 = vset.pattern.permute.xlu0 64
        %1135 = vperm.xlu0 %1134, %v1097
        %v1136 = vpop.permute.xlu0 %1135
        %1137 = vset.pattern.permute.xlu0 64
        %1138 = vperm.xlu0 %1137, %v1098
        %v1139 = vpop.permute.xlu0 %1138
        %1140 = vset.pattern.permute.xlu0 64
        %1141 = vperm.xlu0 %1140, %v1099
        %v1142 = vpop.permute.xlu0 %1141
        %1143 = vset.pattern.permute.xlu0 64
        %1144 = vperm.xlu0 %1143, %v1100
        %v1145 = vpop.permute.xlu0 %1144
        %1146 = vset.pattern.permute.xlu0 64
        %1147 = vperm.xlu0 %1146, %v1101
        %v1148 = vpop.permute.xlu0 %1147
        %1149 = vset.pattern.permute.xlu0 64
        %1150 = vperm.xlu0 %1149, %v1102
        %v1151 = vpop.permute.xlu0 %1150
        %1152 = vset.pattern.permute.xlu0 64
        %1153 = vperm.xlu0 %1152, %v1103
        %v1154 = vpop.permute.xlu0 %1153
        %1155 = vset.pattern.permute.xlu0 64
        %1156 = vperm.xlu0 %1155, %v1104
        %v1157 = vpop.permute.xlu0 %1156
        %1158 = vset.pattern.permute.xlu0 64
        %1159 = vperm.xlu0 %1158, %v1105
        %v1160 = vpop.permute.xlu0 %1159
        %1161 = vset.pattern.permute.xlu0 64
        %1162 = vperm.xlu0 %1161, %v1106
        %v1163 = vpop.permute.xlu0 %1162
        %1164 = vset.pattern.permute.xlu0 64
        %1165 = vperm.xlu0 %1164, %v1107
        %v1166 = vpop.permute.xlu0 %1165
        %1167 = vset.pattern.permute.xlu0 64
        %1168 = vperm.xlu0 %1167, %v1108
        %v1169 = vpop.permute.xlu0 %1168
        %1170 = vset.pattern.permute.xlu0 64
        %1171 = vperm.xlu0 %1170, %v1109
        %v1172 = vpop.permute.xlu0 %1171
        %1173 = vset.pattern.permute.xlu0 64
        %1174 = vperm.xlu0 %1173, %v1110
        %v1175 = vpop.permute.xlu0 %1174
        %v1176 = vlaneseq
        %v1177 = vand.u32 %v1176, 127
        %v1178 = vlaneseq
        %v1179 = vshrl.u32 %v1178, 7
        %v1180 = vsub.s32 %v1177, %v1179
        %v1181 = vrot.slane %v1130, %v1180
        %v1182 = vadd.s32 %v1177, 4294967288
        %v1183 = vlaneseq
        %v1184 = vshrl.u32 %v1183, 7
        %v1185 = vsub.s32 %v1182, %v1184
        %v1186 = vrot.slane %v1133, %v1185
        %vm1187 = vcmask 130112
        %v1188 = vsel %vm1187, %v1186, %v1181
        %v1189 = vlaneseq
        %v1190 = vshrl.u32 %v1189, 7
        %v1191 = vsub.s32 %v1177, %v1190
        %v1192 = vrot.slane %v1136, %v1191
        %v1193 = vlaneseq
        %v1194 = vshrl.u32 %v1193, 7
        %v1195 = vsub.s32 %v1182, %v1194
        %v1196 = vrot.slane %v1139, %v1195
        %v1197 = vsel %vm1187, %v1196, %v1192
        %v1198 = vlaneseq
        %v1199 = vshrl.u32 %v1198, 7
        %v1200 = vsub.s32 %v1177, %v1199
        %v1201 = vrot.slane %v1142, %v1200
        %v1202 = vlaneseq
        %v1203 = vshrl.u32 %v1202, 7
        %v1204 = vsub.s32 %v1182, %v1203
        %v1205 = vrot.slane %v1145, %v1204
        %v1206 = vsel %vm1187, %v1205, %v1201
        %v1207 = vlaneseq
        %v1208 = vshrl.u32 %v1207, 7
        %v1209 = vsub.s32 %v1177, %v1208
        %v1210 = vrot.slane %v1148, %v1209
        %v1211 = vlaneseq
        %v1212 = vshrl.u32 %v1211, 7
        %v1213 = vsub.s32 %v1182, %v1212
        %v1214 = vrot.slane %v1151, %v1213
        %v1215 = vsel %vm1187, %v1214, %v1210
        %v1216 = vlaneseq
        %v1217 = vshrl.u32 %v1216, 7
        %v1218 = vsub.s32 %v1177, %v1217
        %v1219 = vrot.slane %v1154, %v1218
        %v1220 = vlaneseq
        %v1221 = vshrl.u32 %v1220, 7
        %v1222 = vsub.s32 %v1182, %v1221
        %v1223 = vrot.slane %v1157, %v1222
        %v1224 = vsel %vm1187, %v1223, %v1219
        %v1225 = vlaneseq
        %v1226 = vshrl.u32 %v1225, 7
        %v1227 = vsub.s32 %v1177, %v1226
        %v1228 = vrot.slane %v1160, %v1227
        %v1229 = vlaneseq
        %v1230 = vshrl.u32 %v1229, 7
        %v1231 = vsub.s32 %v1182, %v1230
        %v1232 = vrot.slane %v1163, %v1231
        %v1233 = vsel %vm1187, %v1232, %v1228
        %v1234 = vlaneseq
        %v1235 = vshrl.u32 %v1234, 7
        %v1236 = vsub.s32 %v1177, %v1235
        %v1237 = vrot.slane %v1166, %v1236
        %v1238 = vlaneseq
        %v1239 = vshrl.u32 %v1238, 7
        %v1240 = vsub.s32 %v1182, %v1239
        %v1241 = vrot.slane %v1169, %v1240
        %v1242 = vsel %vm1187, %v1241, %v1237
        %v1243 = vlaneseq
        %v1244 = vshrl.u32 %v1243, 7
        %v1245 = vsub.s32 %v1177, %v1244
        %v1246 = vrot.slane %v1172, %v1245
        %v1247 = vlaneseq
        %v1248 = vshrl.u32 %v1247, 7
        %v1249 = vsub.s32 %v1182, %v1248
        %v1250 = vrot.slane %v1175, %v1249
        %v1251 = vsel %vm1187, %v1250, %v1246
        %vm1252 = vcmask 1041409
        %v1253 = vsel %vm1252, %v1197, %v1188
        %vm1254 = vcmask 1042434
        %v1255 = vsel %vm1254, %v1206, %v1253
        %vm1256 = vcmask 1043459
        %v1257 = vsel %vm1256, %v1215, %v1255
        %vm1258 = vcmask 1044484
        %v1259 = vsel %vm1258, %v1224, %v1257
        %vm1260 = vcmask 1045509
        %v1261 = vsel %vm1260, %v1233, %v1259
        %vm1262 = vcmask 1046534
        %v1263 = vsel %vm1262, %v1242, %v1261
        %vm1264 = vcmask 1047559
        %v1265 = vsel %vm1264, %v1251, %v1263
        %v1267 = vsel %vm1111, %v1265, -1e+30
        %v1268 = vsel %vm515, %v1267, -inf
        %1269 = vmax.xlane.f32.xlu0 %v1268
        %v1270 = vpop.xlane.xlu0 %1269
        %v1271 = vsub.f32 %v1267, %v1270
        %v1272 = vmul.f32 %v1271, 1.442695
        %v1273 = vpow.pop %v1272
        %v1274 = vmul.f32 %v1273, %v504
        %v1275 = vsel %vm515, %v1274, 0.0
        %1276 = vadd.xlane.f32.xlu0 %v1275
        %v1277 = vpop.xlane.xlu0 %1276
        %v1278 = vrcp.pop %v1277
        %v1279 = vmul.f32 %v1274, %v1278
        %v1280 = vlaneseq
        %v1281 = vshrl.u32 %v1280, 7
        %v1282 = vsub.s32 0, %v1281
        %v1283 = vrot.slane %v1279, %v1282
        %1285 = vbcast.lane.b32.xlu0 %v1283, 256
        %v1286 = vpop.permute.xlu0 %1285
        %s1288 = sor.u32 256, 8
        %1289 = vbcast.lane.b32.xlu0 %v1283, %s1288
        %v1290 = vpop.permute.xlu0 %1289
        %v1291 = vlaneseq
        %v1292 = vshrl.u32 %v1291, 7
        %v1293 = vsub.s32 1, %v1292
        %v1294 = vrot.slane %v1279, %v1293
        %1296 = vbcast.lane.b32.xlu0 %v1294, 256
        %v1297 = vpop.permute.xlu0 %1296
        %s1299 = sor.u32 256, 8
        %1300 = vbcast.lane.b32.xlu0 %v1294, %s1299
        %v1301 = vpop.permute.xlu0 %1300
        %v1302 = vlaneseq
        %v1303 = vshrl.u32 %v1302, 7
        %v1304 = vsub.s32 2, %v1303
        %v1305 = vrot.slane %v1279, %v1304
        %1307 = vbcast.lane.b32.xlu0 %v1305, 256
        %v1308 = vpop.permute.xlu0 %1307
        %s1310 = sor.u32 256, 8
        %1311 = vbcast.lane.b32.xlu0 %v1305, %s1310
        %v1312 = vpop.permute.xlu0 %1311
        %v1313 = vlaneseq
        %v1314 = vshrl.u32 %v1313, 7
        %v1315 = vsub.s32 3, %v1314
        %v1316 = vrot.slane %v1279, %v1315
        %1318 = vbcast.lane.b32.xlu0 %v1316, 256
        %v1319 = vpop.permute.xlu0 %1318
        %s1321 = sor.u32 256, 8
        %1322 = vbcast.lane.b32.xlu0 %v1316, %s1321
        %v1323 = vpop.permute.xlu0 %1322
        %v1324 = vlaneseq
        %v1325 = vshrl.u32 %v1324, 7
        %v1326 = vsub.s32 4, %v1325
        %v1327 = vrot.slane %v1279, %v1326
        %1329 = vbcast.lane.b32.xlu0 %v1327, 256
        %v1330 = vpop.permute.xlu0 %1329
        %s1332 = sor.u32 256, 8
        %1333 = vbcast.lane.b32.xlu0 %v1327, %s1332
        %v1334 = vpop.permute.xlu0 %1333
        %v1335 = vlaneseq
        %v1336 = vshrl.u32 %v1335, 7
        %v1337 = vsub.s32 5, %v1336
        %v1338 = vrot.slane %v1279, %v1337
        %1340 = vbcast.lane.b32.xlu0 %v1338, 256
        %v1341 = vpop.permute.xlu0 %1340
        %s1343 = sor.u32 256, 8
        %1344 = vbcast.lane.b32.xlu0 %v1338, %s1343
        %v1345 = vpop.permute.xlu0 %1344
        %v1346 = vlaneseq
        %v1347 = vshrl.u32 %v1346, 7
        %v1348 = vsub.s32 6, %v1347
        %v1349 = vrot.slane %v1279, %v1348
        %1351 = vbcast.lane.b32.xlu0 %v1349, 256
        %v1352 = vpop.permute.xlu0 %1351
        %s1354 = sor.u32 256, 8
        %1355 = vbcast.lane.b32.xlu0 %v1349, %s1354
        %v1356 = vpop.permute.xlu0 %1355
        %v1357 = vlaneseq
        %v1358 = vshrl.u32 %v1357, 7
        %v1359 = vsub.s32 7, %v1358
        %v1360 = vrot.slane %v1279, %v1359
        %1362 = vbcast.lane.b32.xlu0 %v1360, 256
        %v1363 = vpop.permute.xlu0 %1362
        %s1365 = sor.u32 256, 8
        %1366 = vbcast.lane.b32.xlu0 %v1360, %s1365
        %v1367 = vpop.permute.xlu0 %1366
        %v1368 = vmul.f32 %v1286, %v947
        %v1369 = vmul.f32 %v1290, %v948
        %v1370 = vmul.f32 %v1297, %v949
        %v1371 = vmul.f32 %v1301, %v950
        %v1372 = vmul.f32 %v1308, %v951
        %v1373 = vmul.f32 %v1312, %v952
        %v1374 = vmul.f32 %v1319, %v953
        %v1375 = vmul.f32 %v1323, %v954
        %v1376 = vmul.f32 %v1330, %v955
        %v1377 = vmul.f32 %v1334, %v956
        %v1378 = vmul.f32 %v1341, %v957
        %v1379 = vmul.f32 %v1345, %v958
        %v1380 = vmul.f32 %v1352, %v959
        %v1381 = vmul.f32 %v1356, %v960
        %v1382 = vmul.f32 %v1363, %v961
        %v1383 = vmul.f32 %v1367, %v962
        %v1384 = vsel %vm985, %v1368, 0.0
        %v1385 = vsel %vm985, %v1369, 0.0
        %v1386 = vadd.f32 %v1384, %v1385
        %v1387 = vrot.slane %v1386, 4
        %v1388 = vadd.f32 %v1386, %v1387
        %v1389 = vrot.slane %v1388, 2
        %v1390 = vadd.f32 %v1388, %v1389
        %v1391 = vrot.slane %v1390, 1
        %v1392 = vadd.f32 %v1390, %v1391
        %v1393 = vsel %vm985, %v1370, 0.0
        %v1394 = vsel %vm985, %v1371, 0.0
        %v1395 = vadd.f32 %v1393, %v1394
        %v1396 = vrot.slane %v1395, 4
        %v1397 = vadd.f32 %v1395, %v1396
        %v1398 = vrot.slane %v1397, 2
        %v1399 = vadd.f32 %v1397, %v1398
        %v1400 = vrot.slane %v1399, 1
        %v1401 = vadd.f32 %v1399, %v1400
        %v1402 = vsel %vm985, %v1372, 0.0
        %v1403 = vsel %vm985, %v1373, 0.0
        %v1404 = vadd.f32 %v1402, %v1403
        %v1405 = vrot.slane %v1404, 4
        %v1406 = vadd.f32 %v1404, %v1405
        %v1407 = vrot.slane %v1406, 2
        %v1408 = vadd.f32 %v1406, %v1407
        %v1409 = vrot.slane %v1408, 1
        %v1410 = vadd.f32 %v1408, %v1409
        %v1411 = vsel %vm985, %v1374, 0.0
        %v1412 = vsel %vm985, %v1375, 0.0
        %v1413 = vadd.f32 %v1411, %v1412
        %v1414 = vrot.slane %v1413, 4
        %v1415 = vadd.f32 %v1413, %v1414
        %v1416 = vrot.slane %v1415, 2
        %v1417 = vadd.f32 %v1415, %v1416
        %v1418 = vrot.slane %v1417, 1
        %v1419 = vadd.f32 %v1417, %v1418
        %v1420 = vsel %vm985, %v1376, 0.0
        %v1421 = vsel %vm985, %v1377, 0.0
        %v1422 = vadd.f32 %v1420, %v1421
        %v1423 = vrot.slane %v1422, 4
        %v1424 = vadd.f32 %v1422, %v1423
        %v1425 = vrot.slane %v1424, 2
        %v1426 = vadd.f32 %v1424, %v1425
        %v1427 = vrot.slane %v1426, 1
        %v1428 = vadd.f32 %v1426, %v1427
        %v1429 = vsel %vm985, %v1378, 0.0
        %v1430 = vsel %vm985, %v1379, 0.0
        %v1431 = vadd.f32 %v1429, %v1430
        %v1432 = vrot.slane %v1431, 4
        %v1433 = vadd.f32 %v1431, %v1432
        %v1434 = vrot.slane %v1433, 2
        %v1435 = vadd.f32 %v1433, %v1434
        %v1436 = vrot.slane %v1435, 1
        %v1437 = vadd.f32 %v1435, %v1436
        %v1438 = vsel %vm985, %v1380, 0.0
        %v1439 = vsel %vm985, %v1381, 0.0
        %v1440 = vadd.f32 %v1438, %v1439
        %v1441 = vrot.slane %v1440, 4
        %v1442 = vadd.f32 %v1440, %v1441
        %v1443 = vrot.slane %v1442, 2
        %v1444 = vadd.f32 %v1442, %v1443
        %v1445 = vrot.slane %v1444, 1
        %v1446 = vadd.f32 %v1444, %v1445
        %v1447 = vsel %vm985, %v1382, 0.0
        %v1448 = vsel %vm985, %v1383, 0.0
        %v1449 = vadd.f32 %v1447, %v1448
        %v1450 = vrot.slane %v1449, 4
        %v1451 = vadd.f32 %v1449, %v1450
        %v1452 = vrot.slane %v1451, 2
        %v1453 = vadd.f32 %v1451, %v1452
        %v1454 = vrot.slane %v1453, 1
        %v1455 = vadd.f32 %v1453, %v1454
        %v1456 = vld [vmem:[%s8] sm:$0xff]
        %v1457 = vld [vmem:[%s8 + $0x8] sm:$0xff]
        %v1458 = vld [vmem:[%s8 + $0x10] sm:$0xff]
        %v1459 = vld [vmem:[%s8 + $0x18] sm:$0xff]
        %v1460 = vld [vmem:[%s9] sm:$0x1]
        %v1462 = vlaneseq
        %v1463 = vshrl.u32 %v1462, 7
        %v1464 = vsub.s32 0, %v1463
        %v1465 = vrot.slane %v1460, %v1464
        %v1475 = vsel %vm1252, %v1401, %v1392
        %v1476 = vsel %vm1254, %v1410, %v1475
        %v1477 = vsel %vm1256, %v1419, %v1476
        %v1478 = vsel %vm1258, %v1428, %v1477
        %v1479 = vsel %vm1260, %v1437, %v1478
        %v1480 = vsel %vm1262, %v1446, %v1479
        %v1481 = vsel %vm1264, %v1455, %v1480
        %v1482 = vsel %vm985, %v1481, 0
        %1484 = vmatprep.subr.mxu0 0.0
        %1485 = vmatpush1.msra.mxu0 %v1456
        %1486 = vmatprep.subr.mxu0 0.0
        %1487 = vmatpush1.msra.mxu0 %v1457
        %1488 = vmatprep.subr.mxu0 0.0
        %1489 = vmatpush1.msra.mxu0 %v1458
        %1490 = vmatprep.subr.mxu0 0.0
        %1491 = vmatpush1.msra.mxu0 %v1459
        %1492 = vmatprep.subr.mxu0 0.0
        %1493 = vmatpush1.msra.mxu0 0.0
        %1494 = vmatprep.subr.mxu0 0.0
        %1495 = vmatpush1.msra.mxu0 0.0
        %1496 = vmatprep.subr.mxu0 0.0
        %1497 = vmatpush1.msra.mxu0 0.0
        %1498 = vmatprep.subr.mxu0 0.0
        %1499 = vmatpush1.msra.mxu0 0.0
        %1500 = vmatprep.subr.mxu0 0.0
        %1501 = vmatpush1.msra.mxu0 0.0
        %1502 = vmatprep.subr.mxu0 0.0
        %1503 = vmatpush1.msra.mxu0 0.0
        %1504 = vmatprep.subr.mxu0 0.0
        %1505 = vmatpush1.msra.mxu0 0.0
        %1506 = vmatprep.subr.mxu0 0.0
        %1507 = vmatpush1.msra.mxu0 0.0
        %1508 = vmatprep.subr.mxu0 0.0
        %1509 = vmatpush1.msra.mxu0 0.0
        %1510 = vmatprep.subr.mxu0 0.0
        %1511 = vmatpush1.msra.mxu0 0.0
        %1512 = vmatprep.subr.mxu0 0.0
        %1513 = vmatpush1.msra.mxu0 0.0
        %1514 = vmatprep.subr.mxu0 0.0
        %1515 = vmatpush1.msra.mxu0 0.0
        %1516 = vmatprep.subr.mxu0 0.0
        %1517 = vmatpush1.msra.mxu0 0.0
        %1518 = vmatprep.subr.mxu0 0.0
        %1519 = vmatpush1.msra.mxu0 0.0
        %1520 = vmatprep.subr.mxu0 0.0
        %1521 = vmatpush1.msra.mxu0 0.0
        %1522 = vmatprep.subr.mxu0 0.0
        %1523 = vmatpush1.msra.mxu0 0.0
        %1524 = vmatprep.subr.mxu0 0.0
        %1525 = vmatpush1.msra.mxu0 0.0
        %1526 = vmatprep.subr.mxu0 0.0
        %1527 = vmatpush1.msra.mxu0 0.0
        %1528 = vmatprep.subr.mxu0 0.0
        %1529 = vmatpush1.msra.mxu0 0.0
        %1530 = vmatprep.subr.mxu0 0.0
        %1531 = vmatpush1.msra.mxu0 0.0
        %1532 = vmatprep.subr.mxu0 0.0
        %1533 = vmatpush1.msra.mxu0 0.0
        %1534 = vmatprep.subr.mxu0 0.0
        %1535 = vmatpush1.msra.mxu0 0.0
        %1536 = vmatprep.subr.mxu0 0.0
        %1537 = vmatpush1.msra.mxu0 0.0
        %1538 = vmatprep.subr.mxu0 0.0
        %1539 = vmatpush1.msra.mxu0 0.0
        %1540 = vmatprep.subr.mxu0 0.0
        %1541 = vmatpush1.msra.mxu0 0.0
        %1542 = vmatprep.subr.mxu0 0.0
        %1543 = vmatpush1.msra.mxu0 0.0
        %1544 = vmatprep.subr.mxu0 0.0
        %1545 = vmatpush1.msra.mxu0 0.0
        %1546 = vmatprep.subr.mxu0 0.0
        %1547 = vmatpush1.msra.mxu0 0.0
        %1548 = vmatprep.mubr.f32.mxu0 0.0
        %1549 = vmatmul.mubr.f32.gmra.mrb[0].mxu0 %v1482
        %v1550 = vpop.f32.mrb[0].mxu0
        %v1551 = vadd.f32 %v1465, %v1550
        %v1552 = vpop.f32.mrb[0].mxu0
        %1553 = vdwg.mxu0
        %vm1554 = vcmp.gt.f32.partialorder %v1551, 0.0
        %v1555 = vmin.f32 %v1551, 0.0
        %v1556 = vmul.f32 %v1555, 1.442695
        %v1557 = vpow.pop %v1556
        %v1558 = vsub.f32 %v1557, 1.0
        %v1559 = vsel %vm1554, %v1551, %v1558
        %v1560 = vld [vmem:[%s10] sm:$0xff]
        %v1561 = vld [vmem:[%s10 + $0x8] sm:$0xff]
        %v1562 = vld [vmem:[%s10 + $0x10] sm:$0xff]
        %v1563 = vld [vmem:[%s10 + $0x18] sm:$0xff]
        %v1564 = vld [vmem:[%s11] sm:$0x1]
        %v1566 = vlaneseq
        %v1567 = vshrl.u32 %v1566, 7
        %v1568 = vsub.s32 0, %v1567
        %v1569 = vrot.slane %v1564, %v1568
        %v1572 = vsel %vm985, %v1559, 0
        %1574 = vmatprep.subr.mxu0 0.0
        %1575 = vmatpush1.msra.mxu0 %v1560
        %1576 = vmatprep.subr.mxu0 0.0
        %1577 = vmatpush1.msra.mxu0 %v1561
        %1578 = vmatprep.subr.mxu0 0.0
        %1579 = vmatpush1.msra.mxu0 %v1562
        %1580 = vmatprep.subr.mxu0 0.0
        %1581 = vmatpush1.msra.mxu0 %v1563
        %1582 = vmatprep.subr.mxu0 0.0
        %1583 = vmatpush1.msra.mxu0 0.0
        %1584 = vmatprep.subr.mxu0 0.0
        %1585 = vmatpush1.msra.mxu0 0.0
        %1586 = vmatprep.subr.mxu0 0.0
        %1587 = vmatpush1.msra.mxu0 0.0
        %1588 = vmatprep.subr.mxu0 0.0
        %1589 = vmatpush1.msra.mxu0 0.0
        %1590 = vmatprep.subr.mxu0 0.0
        %1591 = vmatpush1.msra.mxu0 0.0
        %1592 = vmatprep.subr.mxu0 0.0
        %1593 = vmatpush1.msra.mxu0 0.0
        %1594 = vmatprep.subr.mxu0 0.0
        %1595 = vmatpush1.msra.mxu0 0.0
        %1596 = vmatprep.subr.mxu0 0.0
        %1597 = vmatpush1.msra.mxu0 0.0
        %1598 = vmatprep.subr.mxu0 0.0
        %1599 = vmatpush1.msra.mxu0 0.0
        %1600 = vmatprep.subr.mxu0 0.0
        %1601 = vmatpush1.msra.mxu0 0.0
        %1602 = vmatprep.subr.mxu0 0.0
        %1603 = vmatpush1.msra.mxu0 0.0
        %1604 = vmatprep.subr.mxu0 0.0
        %1605 = vmatpush1.msra.mxu0 0.0
        %1606 = vmatprep.subr.mxu0 0.0
        %1607 = vmatpush1.msra.mxu0 0.0
        %1608 = vmatprep.subr.mxu0 0.0
        %1609 = vmatpush1.msra.mxu0 0.0
        %1610 = vmatprep.subr.mxu0 0.0
        %1611 = vmatpush1.msra.mxu0 0.0
        %1612 = vmatprep.subr.mxu0 0.0
        %1613 = vmatpush1.msra.mxu0 0.0
        %1614 = vmatprep.subr.mxu0 0.0
        %1615 = vmatpush1.msra.mxu0 0.0
        %1616 = vmatprep.subr.mxu0 0.0
        %1617 = vmatpush1.msra.mxu0 0.0
        %1618 = vmatprep.subr.mxu0 0.0
        %1619 = vmatpush1.msra.mxu0 0.0
        %1620 = vmatprep.subr.mxu0 0.0
        %1621 = vmatpush1.msra.mxu0 0.0
        %1622 = vmatprep.subr.mxu0 0.0
        %1623 = vmatpush1.msra.mxu0 0.0
        %1624 = vmatprep.subr.mxu0 0.0
        %1625 = vmatpush1.msra.mxu0 0.0
        %1626 = vmatprep.subr.mxu0 0.0
        %1627 = vmatpush1.msra.mxu0 0.0
        %1628 = vmatprep.subr.mxu0 0.0
        %1629 = vmatpush1.msra.mxu0 0.0
        %1630 = vmatprep.subr.mxu0 0.0
        %1631 = vmatpush1.msra.mxu0 0.0
        %1632 = vmatprep.subr.mxu0 0.0
        %1633 = vmatpush1.msra.mxu0 0.0
        %1634 = vmatprep.subr.mxu0 0.0
        %1635 = vmatpush1.msra.mxu0 0.0
        %1636 = vmatprep.subr.mxu0 0.0
        %1637 = vmatpush1.msra.mxu0 0.0
        %1638 = vmatprep.mubr.f32.mxu0 0.0
        %1639 = vmatmul.mubr.f32.gmra.mrb[0].mxu0 %v1572
        %v1640 = vpop.f32.mrb[0].mxu0
        %v1641 = vadd.f32 %v1569, %v1640
        %v1642 = vpop.f32.mrb[0].mxu0
        %1643 = vdwg.mxu0
        %v1644 = vld [vmem:[%s12] sm:$0xff]
        %v1645 = vld [vmem:[%s12 + $0x8] sm:$0xff]
        %v1646 = vld [vmem:[%s12 + $0x10] sm:$0xff]
        %v1647 = vld [vmem:[%s12 + $0x18] sm:$0xff]
        %v1648 = vld [vmem:[%s13] sm:$0x1]
        %v1650 = vlaneseq
        %v1651 = vshrl.u32 %v1650, 7
        %v1652 = vsub.s32 0, %v1651
        %v1653 = vrot.slane %v1648, %v1652
        %v1656 = vsel %vm985, %v679, 0
        %1658 = vmatprep.subr.mxu0 0.0
        %1659 = vmatpush1.msra.mxu0 %v1644
        %1660 = vmatprep.subr.mxu0 0.0
        %1661 = vmatpush1.msra.mxu0 %v1645
        %1662 = vmatprep.subr.mxu0 0.0
        %1663 = vmatpush1.msra.mxu0 %v1646
        %1664 = vmatprep.subr.mxu0 0.0
        %1665 = vmatpush1.msra.mxu0 %v1647
        %1666 = vmatprep.subr.mxu0 0.0
        %1667 = vmatpush1.msra.mxu0 0.0
        %1668 = vmatprep.subr.mxu0 0.0
        %1669 = vmatpush1.msra.mxu0 0.0
        %1670 = vmatprep.subr.mxu0 0.0
        %1671 = vmatpush1.msra.mxu0 0.0
        %1672 = vmatprep.subr.mxu0 0.0
        %1673 = vmatpush1.msra.mxu0 0.0
        %1674 = vmatprep.subr.mxu0 0.0
        %1675 = vmatpush1.msra.mxu0 0.0
        %1676 = vmatprep.subr.mxu0 0.0
        %1677 = vmatpush1.msra.mxu0 0.0
        %1678 = vmatprep.subr.mxu0 0.0
        %1679 = vmatpush1.msra.mxu0 0.0
        %1680 = vmatprep.subr.mxu0 0.0
        %1681 = vmatpush1.msra.mxu0 0.0
        %1682 = vmatprep.subr.mxu0 0.0
        %1683 = vmatpush1.msra.mxu0 0.0
        %1684 = vmatprep.subr.mxu0 0.0
        %1685 = vmatpush1.msra.mxu0 0.0
        %1686 = vmatprep.subr.mxu0 0.0
        %1687 = vmatpush1.msra.mxu0 0.0
        %1688 = vmatprep.subr.mxu0 0.0
        %1689 = vmatpush1.msra.mxu0 0.0
        %1690 = vmatprep.subr.mxu0 0.0
        %1691 = vmatpush1.msra.mxu0 0.0
        %1692 = vmatprep.subr.mxu0 0.0
        %1693 = vmatpush1.msra.mxu0 0.0
        %1694 = vmatprep.subr.mxu0 0.0
        %1695 = vmatpush1.msra.mxu0 0.0
        %1696 = vmatprep.subr.mxu0 0.0
        %1697 = vmatpush1.msra.mxu0 0.0
        %1698 = vmatprep.subr.mxu0 0.0
        %1699 = vmatpush1.msra.mxu0 0.0
        %1700 = vmatprep.subr.mxu0 0.0
        %1701 = vmatpush1.msra.mxu0 0.0
        %1702 = vmatprep.subr.mxu0 0.0
        %1703 = vmatpush1.msra.mxu0 0.0
        %1704 = vmatprep.subr.mxu0 0.0
        %1705 = vmatpush1.msra.mxu0 0.0
        %1706 = vmatprep.subr.mxu0 0.0
        %1707 = vmatpush1.msra.mxu0 0.0
        %1708 = vmatprep.subr.mxu0 0.0
        %1709 = vmatpush1.msra.mxu0 0.0
        %1710 = vmatprep.subr.mxu0 0.0
        %1711 = vmatpush1.msra.mxu0 0.0
        %1712 = vmatprep.subr.mxu0 0.0
        %1713 = vmatpush1.msra.mxu0 0.0
        %1714 = vmatprep.subr.mxu0 0.0
        %1715 = vmatpush1.msra.mxu0 0.0
        %1716 = vmatprep.subr.mxu0 0.0
        %1717 = vmatpush1.msra.mxu0 0.0
        %1718 = vmatprep.subr.mxu0 0.0
        %1719 = vmatpush1.msra.mxu0 0.0
        %1720 = vmatprep.subr.mxu0 0.0
        %1721 = vmatpush1.msra.mxu0 0.0
        %1722 = vmatprep.mubr.f32.mxu0 0.0
        %1723 = vmatmul.mubr.f32.gmra.mrb[0].mxu0 %v1656
        %v1724 = vpop.f32.mrb[0].mxu0
        %v1725 = vadd.f32 %v1653, %v1724
        %v1726 = vpop.f32.mrb[0].mxu0
        %1727 = vdwg.mxu0
        %v1728 = vadd.f32 %v1641, %v1725
        %v1729 = vxor.u32 %v1728, 2147483648
        %v1730 = vmul.f32 %v1729, 1.442695
        %v1731 = vpow.pop %v1730
        %v1732 = vadd.f32 %v1731, 1.0
        %v1733 = vrcp.pop %v1732
        %v1734 = vmul.f32 1.0, %v1733
        %1736 = vrot.lane.b32.xlu0 %v1725, 64
        %v1737 = vpop.permute.xlu0 %1736
        %v1739 = vmul.f32 %v1734, %v1737
        %1741 = vrot.lane.b32.xlu0 %v1739, 64
        %v1742 = vpop.permute.xlu0 %1741
        %v1744 = vadd.f32 %v1641, %v1742
        %v1745 = vtanh.pop %v1744
        %v1746 = vsub.f32 1.0, %v1734
        %1748 = vrot.lane.b32.xlu0 %v1745, 96
        %v1749 = vpop.permute.xlu0 %1748
        %v1751 = vmul.f32 %v1746, %v1749
        %1752 = vrot.lane.b32.xlu0 %v679, 32
        %v1753 = vpop.permute.xlu0 %1752
        %v1755 = vmul.f32 %v1734, %v1753
        %v1756 = vadd.f32 %v1751, %v1755
        %v1757 = vmax.f32 %v1756, 0.0
        %1759 = vrot.lane.b32.xlu0 %v1757, 96
        %v1760 = vpop.permute.xlu0 %1759
        %1762 = vst.msk [vmem:[%s487] sm:$0xff] %vm985, %v1760
        %s1763 = sand.u32 %s345, 1
        %s1764 = scalar_lea.sflag [#allocation3], %s1763
        %s1765 = sand.u32 %s345, 1
        %s1766 = smul.addr %s1765, 8
        %s1767 = scalar_lea.vmem [#allocation2], %s1766
        // Predicated region
        $region77: #{tpu_custom_call.1} parent=75 // pred_check
          %p1768 = pneg %p355
        $region78: #{tpu_custom_call.1} parent=75 // pred_check_branch
          %1770 = sbr.rel (%p1768) target = $region80
        $region79: #{tpu_custom_call.1} parent=75 // pred_region
          %s1772 = ssub.s32 128, 128
          %1773 = vsyncadd %s1764, %s1772
          %s1774 = smul.addr %s28, 128
          %s1775 = scalar_lea.hbm %s14, %s1774
          %s1777 = sshll.u32 %s1767, 4
          %s1778 = int_to_ptr.vmem [resolvable:$true] %s1777
          %1780 = dma.vmem_to_hbm [thread:$0]  %s1778, 128, %s1775, %s1764
        $region80: #{tpu_custom_call.1} parent=75 // pred_fallthru
          _
      $region76: #{tpu_custom_call.1} parent=5 // pred_fallthru
        _
      %p1781 = scmp.le.s32.totalorder 2, %s23
      // Predicated region
      $region81: #{tpu_custom_call.1} parent=5 // pred_check
        %p1782 = pneg %p1781
      $region82: #{tpu_custom_call.1} parent=5 // pred_check_branch
        %1784 = sbr.rel (%p1782) target = $region84
      $region83: #{tpu_custom_call.1} parent=5 // pred_region
        %s1785 = ssub.s32 %s23, 2
        // Predicated region
        $region85: #{tpu_custom_call.1} parent=83 // pred_check
          %p1786 = pneg %p361
        $region86: #{tpu_custom_call.1} parent=83 // pred_check_branch
          %1788 = sbr.rel (%p1786) target = $region88
        $region87: #{tpu_custom_call.1} parent=83 // pred_region
          %s1789 = sand.u32 %s346, 1
          %s1790 = scalar_lea.sflag [#allocation3], %s1789
          %s1791 = sand.u32 %s346, 1
          %s1792 = smul.addr %s1791, 8
          %s1793 = scalar_lea.vmem [#allocation2], %s1792
          %1794 = dma.done %s1790, 128
        $region88: #{tpu_custom_call.1} parent=83 // pred_fallthru
          _
      $region84: #{tpu_custom_call.1} parent=5 // pred_fallthru
        _
    $region6: #{tpu_custom_call.1} parent=1 // loop_footer
      %s27 = sadd.s32 1, %s23
    $region7: #{tpu_custom_call.1} parent=1 // loop_footer_branch
      %22 = sbr.rel target = $region3
    $region8: #{tpu_custom_call.1} parent=1 // loop_exit
      _
    %1795 = vsyncpa [#allocation3], 1
    %s1796 = scalar_lea.sflag [#allocation3], 1
    %1797 = vsyncpa %s1796, 1

</llo_original>
